<compile_context>
chip_gen: v7x
topology: tpu7x:2x2x1
jax: 0.10.0
libtpu: 0.0.40
codegen_flags: <defaults>
</compile_context>

<pallas_src>
from functools import partial

import numpy as np
import jax
import jax.numpy as jnp
from jax.experimental import pallas as pl
from jax.experimental.pallas import tpu as pltpu

MAX_NB0 = 15
HIDDEN = 32
LATENT = 32
VOCAB = 64

_PACK = 4                       # neighbors packed side-by-side in 128 lanes
_PACKW = _PACK * HIDDEN         # 128 packed lane width
_NB_SLOTS = 16                  # MAX_NB0 padded 15 -> 16
_OUT_LANES = 128                # lane-dense output width for scoring heads
_TM_MAX = 512                   # max rows per grid step
_CP = pltpu.CompilerParams(dimension_semantics=("parallel",))


# ----------------------------------------------------------------------------
# Pallas kernels
# ----------------------------------------------------------------------------
def _gru_kernel(x_ref, hnei_ref, wzx_ref, wzh_ref, bz_ref, wrt_ref, brt_ref,
                urb_ref, whx_ref, bh_ref, whh_ref, fold_ref, out_ref):
    """Tree-GRU: new_h = (1-z)*sum_h + z*tanh(W_h([x, sum(r*h)])).

    h_nei arrives lane-packed: [G, TM, 4*H] with 4 neighbors per 128 lanes.
    """
    H = HIDDEN
    x = x_ref[...]                                   # [TM, H]
    hp = hnei_ref[...]                               # [G, TM, 128]
    g, tm, pw = hp.shape
    h2 = hp.reshape(g * tm, pw)                      # layout no-op merge
    fold = fold_ref[...]                             # [128, H] stacked identity

    # neighbour sum: (G-1) full-lane VPU adds, then one fold matmul -> [TM, H]
    psum = hp[0]
    for k in range(1, g):
        psum = psum + hp[k]
    sum_h = jnp.dot(psum, fold, preferred_element_type=jnp.float32)

    # z gate: two accumulated K=32 matmuls (no lane concat, no offset slicing)
    z = jax.nn.sigmoid(
        jnp.dot(x, wzx_ref[...], preferred_element_type=jnp.float32)
        + jnp.dot(sum_h, wzh_ref[...], preferred_element_type=jnp.float32)
        + bz_ref[...])

    # r gate, lane-packed: r_x tiled over the 4 neighbour lane slots,
    # single full-width MXU push for U_r over ALL neighbours.
    rx = (jnp.dot(x, wrt_ref[...], preferred_element_type=jnp.float32)
          + brt_ref[...])                            # [TM, 128]
    r2 = jnp.dot(h2, urb_ref[...],
                 preferred_element_type=jnp.float32)  # [G*TM, 128]
    gsum = jnp.zeros((tm, pw), jnp.float32)
    for k in range(g):
        hk = h2[k * tm:(k + 1) * tm, :]
        rk = jax.nn.sigmoid(rx + r2[k * tm:(k + 1) * tm, :])
        gsum = gsum + rk * hk                        # padded slots: h == 0
    sum_gated = jnp.dot(gsum, fold, preferred_element_type=jnp.float32)

    hx = (jnp.dot(x, whx_ref[...], preferred_element_type=jnp.float32)
          + bh_ref[...])
    pre_h = jnp.tanh(hx + jnp.dot(sum_gated, whh_ref[...],
                                  preferred_element_type=jnp.float32))
    out_ref[...] = (1.0 - z) * sum_h + z * pre_h
    # TODO(synk): optionally emit the GRU output lane-packed ([TM/4,128]) to
    # avoid masked partial stores; kept [TM,32] so the scatter stays simple.


def _stop_kernel(x_ref, onei_ref, ctx_ref, uix_ref, uio_ref, bi_ref,
                 uh_ref, uc_ref, ub_ref, uo_ref, uob_ref, fold_ref, out_ref):
    """Fused stop head: U_o(relu(U([relu(U_i([x, sum(o_nei)])), ctx])))."""
    x = x_ref[...]                                   # [TM, H]
    op = onei_ref[...]                               # [G, TM, 128]
    g = op.shape[0]
    psum = op[0]
    for k in range(1, g):
        psum = psum + op[k]
    cur_o = jnp.dot(psum, fold_ref[...], preferred_element_type=jnp.float32)

    hid = jnp.maximum(
        jnp.dot(x, uix_ref[...], preferred_element_type=jnp.float32)
        + jnp.dot(cur_o, uio_ref[...], preferred_element_type=jnp.float32)
        + bi_ref[...], 0.0)
    inner = jnp.maximum(
        jnp.dot(hid, uh_ref[...], preferred_element_type=jnp.float32)
        + jnp.dot(ctx_ref[...], uc_ref[...], preferred_element_type=jnp.float32)
        + ub_ref[...], 0.0)
    # lane-dense [TM, 128] output; real stop score is column 0
    out_ref[...] = (jnp.dot(inner, uo_ref[...],
                            preferred_element_type=jnp.float32) + uob_ref[...])


def _word_kernel(hid_ref, ctx_ref, wh_ref, wc_ref, wb_ref, wo_ref, wob_ref,
                 out_ref):
    """Word head: W_o(relu(W(hid) + W(ctx))); vocab padded to 128 lanes."""
    inner = jnp.maximum(
        jnp.dot(hid_ref[...], wh_ref[...], preferred_element_type=jnp.float32)
        + jnp.dot(ctx_ref[...], wc_ref[...], preferred_element_type=jnp.float32)
        + wb_ref[...], 0.0)
    out_ref[...] = (jnp.dot(inner, wo_ref[...],
                            preferred_element_type=jnp.float32) + wob_ref[...])


# ----------------------------------------------------------------------------
# Pallas wrappers
# ----------------------------------------------------------------------------
def _bucket(n):
    """Round a row count up to a fixed bucket (pow2 up to 512, then x512)."""
    n = max(int(n), 8)
    if n <= _TM_MAX:
        return 1 << (n - 1).bit_length()
    return ((n + _TM_MAX - 1) // _TM_MAX) * _TM_MAX


def _row_tile(n_pad):
    """Row tile: grid >= 2 whenever n_pad >= 16 (both TensorCores on v7x)."""
    tm = min(max(n_pad // 2, 8), _TM_MAX)
    return min(tm, n_pad)


def gru_pallas(x, h_nei, p):
    """x: [Np, H], h_nei: [G, Np, 4*H] -> new_h [Np, H]."""
    n_pad = x.shape[0]
    g = h_nei.shape[0]
    tm = _row_tile(n_pad)
    row = lambda i: (i, 0)
    nei = lambda i: (0, i, 0)
    full = lambda i: (0, 0)
    return pl.pallas_call(
        _gru_kernel,
        out_shape=jax.ShapeDtypeStruct((n_pad, HIDDEN), jnp.float32),
        grid=(n_pad // tm,),
        in_specs=[
            pl.BlockSpec((tm, HIDDEN), row),
            pl.BlockSpec((g, tm, _PACKW), nei),
            pl.BlockSpec((HIDDEN, HIDDEN), full),    # Wz_x
            pl.BlockSpec((HIDDEN, HIDDEN), full),    # Wz_h
            pl.BlockSpec((1, HIDDEN), full),         # bz
            pl.BlockSpec((HIDDEN, _PACKW), full),    # Wr tiled
            pl.BlockSpec((1, _PACKW), full),         # br tiled
            pl.BlockSpec((_PACKW, _PACKW), full),    # Ur block-diag
            pl.BlockSpec((HIDDEN, HIDDEN), full),    # Wh_x
            pl.BlockSpec((1, HIDDEN), full),         # bh
            pl.BlockSpec((HIDDEN, HIDDEN), full),    # Wh_h
            pl.BlockSpec((_PACKW, HIDDEN), full),    # fold
        ],
        out_specs=pl.BlockSpec((tm, HIDDEN), row),
        compiler_params=_CP,
    )(x, h_nei, p["Wz_x"], p["Wz_h"], p["bz"], p["Wr_t"], p["br_t"],
      p["Ur_blk"], p["Wh_x"], p["bh"], p["Wh_h"], p["fold"])


def stop_pallas(x, o_nei, ctx, p):
    """x: [Mp, H], o_nei: [G, Mp, 4*H], ctx: [Mp, L] -> [Mp, 128]."""
    n_pad = x.shape[0]
    g = o_nei.shape[0]
    tm = _row_tile(n_pad)
    row = lambda i: (i, 0)
    nei = lambda i: (0, i, 0)
    full = lambda i: (0, 0)
    return pl.pallas_call(
        _stop_kernel,
        out_shape=jax.ShapeDtypeStruct((n_pad, _OUT_LANES), jnp.float32),
        grid=(n_pad // tm,),
        in_specs=[
            pl.BlockSpec((tm, HIDDEN), row),
            pl.BlockSpec((g, tm, _PACKW), nei),
            pl.BlockSpec((tm, LATENT), row),
            pl.BlockSpec((HIDDEN, HIDDEN), full),    # Ui_x
            pl.BlockSpec((HIDDEN, HIDDEN), full),    # Ui_o
            pl.BlockSpec((1, HIDDEN), full),         # bi
            pl.BlockSpec((HIDDEN, HIDDEN), full),    # U_hid
            pl.BlockSpec((LATENT, HIDDEN), full),    # U_ctx
            pl.BlockSpec((1, HIDDEN), full),         # U_b
            pl.BlockSpec((HIDDEN, _OUT_LANES), full),  # Uo padded
            pl.BlockSpec((1, _OUT_LANES), full),       # Uo bias padded
            pl.BlockSpec((_PACKW, HIDDEN), full),    # fold
        ],
        out_specs=pl.BlockSpec((tm, _OUT_LANES), row),
        compiler_params=_CP,
    )(x, o_nei, ctx, p["Ui_x"], p["Ui_o"], p["bi"], p["U_hid"], p["U_ctx"],
      p["U_b"], p["Uo_pad"], p["Uo_b"], p["fold"])


def word_pallas(hid, ctx, p):
    """hid: [Pp, H], ctx: [Pp, L] -> [Pp, 128] (first VOCAB lanes are real)."""
    n_pad = hid.shape[0]
    tm = _row_tile(n_pad)
    row = lambda i: (i, 0)
    full = lambda i: (0, 0)
    return pl.pallas_call(
        _word_kernel,
        out_shape=jax.ShapeDtypeStruct((n_pad, _OUT_LANES), jnp.float32),
        grid=(n_pad // tm,),
        in_specs=[
            pl.BlockSpec((tm, HIDDEN), row),
            pl.BlockSpec((tm, LATENT), row),
            pl.BlockSpec((HIDDEN, HIDDEN), full),    # W_hid
            pl.BlockSpec((LATENT, HIDDEN), full),    # W_ctx
            pl.BlockSpec((1, HIDDEN), full),         # W_b
            pl.BlockSpec((HIDDEN, _OUT_LANES), full),  # Wo padded
            pl.BlockSpec((1, _OUT_LANES), full),       # Wo bias padded
        ],
        out_specs=pl.BlockSpec((tm, _OUT_LANES), row),
        compiler_params=_CP,
    )(hid, ctx, p["W_hid"], p["W_ctx"], p["W_b"], p["Wo_pad"], p["Wo_b"])


# ----------------------------------------------------------------------------
# Parameters (stored transposed as [in, out] so y = x @ W + b; pre-packed)
# ----------------------------------------------------------------------------
def init_params(key):
    H, L, V = HIDDEN, LATENT, VOCAB
    ks = jax.random.split(key, 24)
    n = lambda k, s: (0.1 * jax.random.normal(k, s)).astype(jnp.float32)

    p = {}
    # GRU: W_z : Linear(2H->H), W_r : Linear(H->H), U_r (no bias), W_h : 2H->H
    p["Wz_x"], p["Wz_h"], p["bz"] = n(ks[0], (H, H)), n(ks[1], (H, H)), n(ks[2], (1, H))
    Wr, br = n(ks[3], (H, H)), n(ks[4], (1, H))
    Ur = n(ks[5], (H, H))
    p["Wh_x"], p["Wh_h"], p["bh"] = n(ks[6], (H, H)), n(ks[7], (H, H)), n(ks[8], (1, H))
    # U_i : Linear(2H->H)
    p["Ui_x"], p["Ui_o"], p["bi"] = n(ks[9], (H, H)), n(ks[10], (H, H)), n(ks[11], (1, H))
    # word head: W : Linear(H+L->H), W_o : Linear(H->V)
    p["W_hid"], p["W_ctx"], p["W_b"] = n(ks[12], (H, H)), n(ks[13], (L, H)), n(ks[14], (1, H))
    Wo, Wob = n(ks[15], (H, V)), n(ks[16], (1, V))
    # stop head: U : Linear(H+L->H), U_o : Linear(H->1)
    p["U_hid"], p["U_ctx"], p["U_b"] = n(ks[17], (H, H)), n(ks[18], (L, H)), n(ks[19], (1, H))
    Uo, Uob = n(ks[20], (H, 1)), n(ks[21], (1, 1))
    p["embedding"] = n(ks[22], (V, H))

    # lane-packed r-gate weights: 4 neighbours side-by-side in 128 lanes
    p["Wr_t"] = jnp.tile(Wr, (1, _PACK))                       # [H, 128]
    p["br_t"] = jnp.tile(br, (1, _PACK))                       # [1, 128]
    ur_blk = jnp.zeros((_PACKW, _PACKW), jnp.float32)
    for q in range(_PACK):
        ur_blk = ur_blk.at[q * H:(q + 1) * H, q * H:(q + 1) * H].set(Ur)
    p["Ur_blk"] = ur_blk                                       # [128, 128]
    p["fold"] = jnp.tile(jnp.eye(H, dtype=jnp.float32), (_PACK, 1))  # [128, H]

    # 128-lane-dense output heads
    p["Wo_pad"] = jnp.zeros((H, _OUT_LANES), jnp.float32).at[:, :V].set(Wo)
    p["Wo_b"] = jnp.zeros((1, _OUT_LANES), jnp.float32).at[:, :V].set(Wob)
    p["Uo_pad"] = jnp.zeros((H, _OUT_LANES), jnp.float32).at[:, :1].set(Uo)
    p["Uo_b"] = jnp.zeros((1, _OUT_LANES), jnp.float32).at[:, :1].set(Uob)
    return p


# ----------------------------------------------------------------------------
# Minimal tree structures + DFS (host-side glue, same semantics as PyTorch)
# ----------------------------------------------------------------------------
class _Node:
    def __init__(self, idx, wid):
        self.idx = idx          # globally unique across the batch
        self.wid = wid
        self.neighbors = []


class _Tree:
    def __init__(self, nodes):
        self.nodes = nodes


def make_tree(wids, edges, idx_offset=0):
    nodes = [_Node(idx_offset + i, int(w)) for i, w in enumerate(wids)]
    for a, b in edges:
        nodes[a].neighbors.append(nodes[b])
        nodes[b].neighbors.append(nodes[a])
    return _Tree(nodes)


def dfs(stack, x, fa_idx):
    for y in x.neighbors:
        if y.idx == fa_idx:
            continue
        stack.append((x, y, 1))
        dfs(stack, y, x.idx)
        stack.append((y, x, 0))


# ----------------------------------------------------------------------------
# Single jitted device program: scan over message passing + both heads
# ----------------------------------------------------------------------------
@partial(jax.jit, static_argnames=("n_msg_rows",))
def _decoder_device(params, x_tree_vecs,
                    step_wids, step_hidx, step_rows,
                    pred_rows, pred_ctx, pred_tgt, pred_mask,
                    stop_wids, stop_oidx, stop_ctx, stop_tgt, stop_mask,
                    inv_batch, *, n_msg_rows):
    H = HIDDEN
    emb = params["embedding"]
    g = step_hidx.shape[1]

    h_msgs0 = jnp.zeros((n_msg_rows, H), jnp.float32)

    def step(h_msgs, xs):
        wids_t, hidx_t, rows_t = xs
        cur_x = jnp.take(emb, wids_t, axis=0)                  # [Np, H]
        nei = jnp.take(h_msgs, hidx_t, axis=0)                 # [g, Np, 4, H]
        nei = nei.reshape(g, hidx_t.shape[1], _PACK * H)       # [g, Np, 128]
        new_h = gru_pallas(cur_x, nei, params)                 # [Np, H]
        h_msgs = h_msgs.at[rows_t].set(new_h)                  # in-place carry
        return h_msgs, None

    h_msgs, _ = jax.lax.scan(step, h_msgs0, (step_wids, step_hidx, step_rows))

    # ----- word ("pred") head -----
    pred_hid = jnp.take(h_msgs, pred_rows, axis=0)
    pred_cv = jnp.take(x_tree_vecs, pred_ctx, axis=0)
    word_scores = word_pallas(pred_hid, pred_cv, params)[:, :VOCAB]
    lse = jax.scipy.special.logsumexp(word_scores, axis=1)
    true_logit = jnp.take_along_axis(word_scores, pred_tgt[:, None], axis=1)[:, 0]
    pred_loss = jnp.sum(pred_mask * (lse - true_logit)) * inv_batch
    preds = jnp.argmax(word_scores, axis=1)
    pred_acc = (jnp.sum(pred_mask * (preds == pred_tgt).astype(jnp.float32))
                / jnp.sum(pred_mask))

    # ----- stop head -----
    stop_x = jnp.take(emb, stop_wids, axis=0)
    onei = jnp.take(h_msgs, stop_oidx, axis=0)
    onei = onei.reshape(stop_oidx.shape[0], stop_oidx.shape[1], _PACK * H)
    stop_cv = jnp.take(x_tree_vecs, stop_ctx, axis=0)
    stop_scores = stop_pallas(stop_x, onei, stop_cv, params)[:, 0]
    stop_loss = jnp.sum(stop_mask * (
        stop_tgt * jax.nn.softplus(-stop_scores)
        + (1.0 - stop_tgt) * jax.nn.softplus(stop_scores))) * inv_batch
    stops = (stop_scores >= 0).astype(jnp.float32)
    stop_acc = (jnp.sum(stop_mask * (stops == stop_tgt).astype(jnp.float32))
                / jnp.sum(stop_mask))

    return pred_loss, stop_loss, pred_acc, stop_acc


# ----------------------------------------------------------------------------
# JTNNDecoder forward (teacher-forced training pass)
# ----------------------------------------------------------------------------
def jtnn_decoder_forward(mol_batch, x_tree_vecs, params):
    batch_size = len(mol_batch)

    traces = []
    for mol_tree in mol_batch:
        s = []
        dfs(s, mol_tree.nodes[0], -1)
        traces.append(s)
        for node in mol_tree.nodes:
            node.neighbors = []

    # one device buffer holds every directed-edge message:
    #   row 0            : zeros (padding + initial root hidden)
    #   rows 1..E        : messages in creation order
    #   row E+1 ("DUMP") : scatter target for padded GRU rows (never read)
    total_msgs = sum(len(tr) for tr in traces)
    DUMP = total_msgs + 1
    n_msg_rows = ((total_msgs + 2 + 7) // 8) * 8
    msg_row = {}
    next_row = 1

    max_iter = max((len(tr) for tr in traces), default=0)

    step_wids, step_hrows, step_newrows = [], [], []
    pred_rows = [0] * batch_size                    # zero hiddens for roots
    pred_targets = [t.nodes[0].wid for t in mol_batch]
    pred_ctx = list(range(batch_size))
    stop_wids, stop_orows, stop_ctx, stop_targets = [], [], [], []
    max_nei = 1

    for t in range(max_iter):
        prop_list, batch_list = [], []
        for i, plist in enumerate(traces):
            if t < len(plist):
                prop_list.append(plist[t])
                batch_list.append(i)

        wids_t, hrows_t, newrows_t = [], [], []
        for node_x, real_y, _ in prop_list:
            o_rows = [msg_row[(ny.idx, node_x.idx)] for ny in node_x.neighbors]
            h_rows = [msg_row[(ny.idx, node_x.idx)] for ny in node_x.neighbors
                      if ny.idx != real_y.idx]
            max_nei = max(max_nei, len(o_rows), len(h_rows))
            wids_t.append(node_x.wid)
            hrows_t.append(h_rows + [0] * (_NB_SLOTS - len(h_rows)))
            stop_orows.append(o_rows + [0] * (_NB_SLOTS - len(o_rows)))
            msg_row[(node_x.idx, real_y.idx)] = next_row
            newrows_t.append(next_row)
            next_row += 1

        for i, (node_x, node_y, direction) in enumerate(prop_list):
            node_y.neighbors.append(node_x)
            if direction == 1:
                pred_rows.append(newrows_t[i])
                pred_targets.append(node_y.wid)
                pred_ctx.append(batch_list[i])
            stop_targets.append(direction)
            stop_ctx.append(batch_list[i])
            stop_wids.append(node_x.wid)

        step_wids.append(wids_t)
        step_hrows.append(hrows_t)
        step_newrows.append(newrows_t)

    # final stop prediction at the roots
    for bi, mol_tree in enumerate(mol_batch):
        node_x = mol_tree.nodes[0]
        o_rows = [msg_row[(ny.idx, node_x.idx)] for ny in node_x.neighbors]
        max_nei = max(max_nei, len(o_rows))
        stop_wids.append(node_x.wid)
        stop_orows.append(o_rows + [0] * (_NB_SLOTS - len(o_rows)))
        stop_ctx.append(bi)
        stop_targets.append(0)

    # degree-bucketed packed-group count (1 / 2 / 4 groups of 4 neighbours)
    g = -(-max_nei // _PACK)
    g = 1 if g <= 1 else (2 if g <= 2 else 4)

    # stack per-timestep index arrays into fixed-bucket scan inputs
    T = max_iter
    max_rows = max((len(w) for w in step_wids), default=1)
    n_pad = _bucket(max_rows)
    wids_np = np.zeros((T, n_pad), np.int32)
    hidx_np = np.zeros((T, g, n_pad, _PACK), np.int32)       # 0 -> zero row
    rows_np = np.full((T, n_pad), DUMP, np.int32)
    for t in range(T):
        k = len(step_wids[t])
        wids_np[t, :k] = step_wids[t]
        rows_np[t, :k] = step_newrows[t]
        hr = np.asarray(step_hrows[t], np.int32)[:, :g * _PACK]
        hidx_np[t, :, :k, :] = hr.reshape(k, g, _PACK).transpose(1, 0, 2)

    # word head inputs
    P = len(pred_rows)
    P_pad = _bucket(P)
    pr = np.zeros((P_pad,), np.int32); pr[:P] = pred_rows
    pc = np.zeros((P_pad,), np.int32); pc[:P] = pred_ctx
    pt = np.zeros((P_pad,), np.int32); pt[:P] = pred_targets
    pm = np.zeros((P_pad,), np.float32); pm[:P] = 1.0

    # stop head inputs
    M = len(stop_wids)
    M_pad = _bucket(M)
    sw = np.zeros((M_pad,), np.int32); sw[:M] = stop_wids
    sc = np.zeros((M_pad,), np.int32); sc[:M] = stop_ctx
    st = np.zeros((M_pad,), np.float32); st[:M] = stop_targets
    sm = np.zeros((M_pad,), np.float32); sm[:M] = 1.0
    so = np.zeros((g, M_pad, _PACK), np.int32)
    orr = np.asarray(stop_orows, np.int32)[:, :g * _PACK]
    so[:, :M, :] = orr.reshape(M, g, _PACK).transpose(1, 0, 2)

    return _decoder_device(
        params, x_tree_vecs,
        jnp.asarray(wids_np), jnp.asarray(hidx_np), jnp.asarray(rows_np),
        jnp.asarray(pr), jnp.asarray(pc), jnp.asarray(pt), jnp.asarray(pm),
        jnp.asarray(sw), jnp.asarray(so), jnp.asarray(sc), jnp.asarray(st),
        jnp.asarray(sm), jnp.float32(1.0 / batch_size),
        n_msg_rows=n_msg_rows)

# TODO(synk): decode() (greedy tree search with RDKit-based have_slots /
# can_assemble checks) is host-side search logic with no Pallas equivalent.


# ----------------------------------------------------------------------------
if __name__ == "__main__":
    key = jax.random.PRNGKey(0)
    k_par, k_wid, k_vec = jax.random.split(key, 3)

    params = init_params(k_par)

    wids = np.asarray(jax.random.randint(k_wid, (8,), 0, VOCAB))
    # tree 0: chain 0-1-2-3 ; tree 1: star centered at 0 with leaves 1,2,3
    tree0 = make_tree(wids[:4], [(0, 1), (1, 2), (2, 3)], idx_offset=0)
    tree1 = make_tree(wids[4:], [(0, 1), (0, 2), (0, 3)], idx_offset=4)
    mol_batch = [tree0, tree1]

    x_tree_vecs = jax.random.normal(k_vec, (len(mol_batch), LATENT),
                                    dtype=jnp.float32)

    pred_loss, stop_loss, pred_acc, stop_acc = jtnn_decoder_forward(
        mol_batch, x_tree_vecs, params)
    jax.block_until_ready((pred_loss, stop_loss, pred_acc, stop_acc))
    print("KERNEL_OK")
</pallas_src>

<mosaic_0001>
module attributes {stable_mosaic.version = 11 : i64} {
  func.func @_gru_kernel(%arg0: i32, %arg1: memref<8x32xf32, #tpu.memory_space<vmem>>, %arg2: memref<1x8x128xf32, #tpu.memory_space<vmem>>, %arg3: memref<32x32xf32, #tpu.memory_space<vmem>>, %arg4: memref<32x32xf32, #tpu.memory_space<vmem>>, %arg5: memref<1x32xf32, #tpu.memory_space<vmem>>, %arg6: memref<32x128xf32, #tpu.memory_space<vmem>>, %arg7: memref<1x128xf32, #tpu.memory_space<vmem>>, %arg8: memref<128x128xf32, #tpu.memory_space<vmem>>, %arg9: memref<32x32xf32, #tpu.memory_space<vmem>>, %arg10: memref<1x32xf32, #tpu.memory_space<vmem>>, %arg11: memref<32x32xf32, #tpu.memory_space<vmem>>, %arg12: memref<128x32xf32, #tpu.memory_space<vmem>>, %arg13: memref<8x32xf32, #tpu.memory_space<vmem>>) attributes {dimension_semantics = [#tpu.dimension_semantics<parallel>], iteration_bounds = array<i64: 1>, scalar_prefetch = 0 : i64, scratch_operands = 0 : i64, tpu.core_type = #tpu.core_type<tc>, window_params = [{transform_indices = @transform_0, window_bounds = array<i64: 8, 32>}, {transform_indices = @transform_1, window_bounds = array<i64: 1, 8, 128>}, {pipeline_mode = #tpu.pipeline_mode<synchronous>, transform_indices = @transform_2, window_bounds = array<i64: 32, 32>}, {pipeline_mode = #tpu.pipeline_mode<synchronous>, transform_indices = @transform_3, window_bounds = array<i64: 32, 32>}, {pipeline_mode = #tpu.pipeline_mode<synchronous>, transform_indices = @transform_4, window_bounds = array<i64: 1, 32>}, {pipeline_mode = #tpu.pipeline_mode<synchronous>, transform_indices = @transform_5, window_bounds = array<i64: 32, 128>}, {pipeline_mode = #tpu.pipeline_mode<synchronous>, transform_indices = @transform_6, window_bounds = array<i64: 1, 128>}, {pipeline_mode = #tpu.pipeline_mode<synchronous>, transform_indices = @transform_7, window_bounds = array<i64: 128, 128>}, {pipeline_mode = #tpu.pipeline_mode<synchronous>, transform_indices = @transform_8, window_bounds = array<i64: 32, 32>}, {pipeline_mode = #tpu.pipeline_mode<synchronous>, transform_indices = @transform_9, window_bounds = array<i64: 1, 32>}, {pipeline_mode = #tpu.pipeline_mode<synchronous>, transform_indices = @transform_10, window_bounds = array<i64: 32, 32>}, {pipeline_mode = #tpu.pipeline_mode<synchronous>, transform_indices = @transform_11, window_bounds = array<i64: 128, 32>}, {transform_indices = @transform_12, window_bounds = array<i64: 8, 32>}]} {
    %c0 = arith.constant 0 : index
    %c0_0 = arith.constant 0 : index
    %0 = vector.load %arg1[%c0, %c0_0] : memref<8x32xf32, #tpu.memory_space<vmem>>, vector<8x32xf32>
    %c0_1 = arith.constant 0 : index
    %c0_2 = arith.constant 0 : index
    %c0_3 = arith.constant 0 : index
    %1 = vector.load %arg2[%c0_1, %c0_2, %c0_3] : memref<1x8x128xf32, #tpu.memory_space<vmem>>, vector<1x8x128xf32>
    %2 = vector.shape_cast %1 : vector<1x8x128xf32> to vector<8x128xf32>
    %c0_4 = arith.constant 0 : index
    %c0_5 = arith.constant 0 : index
    %3 = vector.load %arg12[%c0_4, %c0_5] : memref<128x32xf32, #tpu.memory_space<vmem>>, vector<128x32xf32>
    %4 = vector.shape_cast %1 : vector<1x8x128xf32> to vector<8x128xf32>
    %cst = arith.constant dense<0.000000e+00> : vector<8x32xf32>
    %5 = tpu.matmul %4, %3, %cst {dimension_numbers = #tpu.dot_dimension_numbers<[1], [0], [0], [1], [0, 0, 1, 1], [], []>} : vector<8x128xf32>, vector<128x32xf32>, vector<8x32xf32> -> vector<8x32xf32>
    %c0_6 = arith.constant 0 : index
    %c0_7 = arith.constant 0 : index
    %6 = vector.load %arg3[%c0_6, %c0_7] : memref<32x32xf32, #tpu.memory_space<vmem>>, vector<32x32xf32>
    %cst_8 = arith.constant dense<0.000000e+00> : vector<8x32xf32>
    %7 = tpu.matmul %0, %6, %cst_8 {dimension_numbers = #tpu.dot_dimension_numbers<[1], [0], [0], [1], [0, 0, 1, 1], [], []>} : vector<8x32xf32>, vector<32x32xf32>, vector<8x32xf32> -> vector<8x32xf32>
    %c0_9 = arith.constant 0 : index
    %c0_10 = arith.constant 0 : index
    %8 = vector.load %arg4[%c0_9, %c0_10] : memref<32x32xf32, #tpu.memory_space<vmem>>, vector<32x32xf32>
    %cst_11 = arith.constant dense<0.000000e+00> : vector<8x32xf32>
    %9 = tpu.matmul %5, %8, %cst_11 {dimension_numbers = #tpu.dot_dimension_numbers<[1], [0], [0], [1], [0, 0, 1, 1], [], []>} : vector<8x32xf32>, vector<32x32xf32>, vector<8x32xf32> -> vector<8x32xf32>
    %10 = arith.addf %7, %9 : vector<8x32xf32>
    %c0_12 = arith.constant 0 : index
    %c0_13 = arith.constant 0 : index
    %11 = vector.load %arg5[%c0_12, %c0_13] : memref<1x32xf32, #tpu.memory_space<vmem>>, vector<1x32xf32>
    %12 = vector.broadcast %11 : vector<1x32xf32> to vector<8x32xf32>
    %13 = arith.addf %10, %12 : vector<8x32xf32>
    %14 = arith.negf %13 : vector<8x32xf32>
    %15 = math.exp %14 : vector<8x32xf32>
    %cst_14 = arith.constant 1.000000e+00 : f32
    %16 = vector.broadcast %cst_14 : f32 to vector<8x32xf32>
    %17 = arith.addf %16, %15 : vector<8x32xf32>
    %18 = arith.divf %16, %17 : vector<8x32xf32>
    %c0_15 = arith.constant 0 : index
    %c0_16 = arith.constant 0 : index
    %19 = vector.load %arg6[%c0_15, %c0_16] : memref<32x128xf32, #tpu.memory_space<vmem>>, vector<32x128xf32>
    %cst_17 = arith.constant dense<0.000000e+00> : vector<8x128xf32>
    %20 = tpu.matmul %0, %19, %cst_17 {dimension_numbers = #tpu.dot_dimension_numbers<[1], [0], [0], [1], [0, 0, 1, 1], [], []>} : vector<8x32xf32>, vector<32x128xf32>, vector<8x128xf32> -> vector<8x128xf32>
    %c0_18 = arith.constant 0 : index
    %c0_19 = arith.constant 0 : index
    %21 = vector.load %arg7[%c0_18, %c0_19] : memref<1x128xf32, #tpu.memory_space<vmem>>, vector<1x128xf32>
    %22 = vector.broadcast %21 : vector<1x128xf32> to vector<8x128xf32>
    %23 = arith.addf %20, %22 : vector<8x128xf32>
    %c0_20 = arith.constant 0 : index
    %c0_21 = arith.constant 0 : index
    %24 = vector.load %arg8[%c0_20, %c0_21] : memref<128x128xf32, #tpu.memory_space<vmem>>, vector<128x128xf32>
    %cst_22 = arith.constant dense<0.000000e+00> : vector<8x128xf32>
    %25 = tpu.matmul %2, %24, %cst_22 {dimension_numbers = #tpu.dot_dimension_numbers<[1], [0], [0], [1], [0, 0, 1, 1], [], []>} : vector<8x128xf32>, vector<128x128xf32>, vector<8x128xf32> -> vector<8x128xf32>
    %cst_23 = arith.constant 0.000000e+00 : f32
    %26 = vector.broadcast %cst_23 : f32 to vector<8x128xf32>
    %27 = arith.addf %23, %25 : vector<8x128xf32>
    %28 = arith.negf %27 : vector<8x128xf32>
    %29 = math.exp %28 : vector<8x128xf32>
    %cst_24 = arith.constant 1.000000e+00 : f32
    %30 = vector.broadcast %cst_24 : f32 to vector<8x128xf32>
    %31 = arith.addf %30, %29 : vector<8x128xf32>
    %32 = arith.divf %30, %31 : vector<8x128xf32>
    %33 = arith.mulf %32, %2 : vector<8x128xf32>
    %34 = arith.addf %26, %33 : vector<8x128xf32>
    %cst_25 = arith.constant dense<0.000000e+00> : vector<8x32xf32>
    %35 = tpu.matmul %34, %3, %cst_25 {dimension_numbers = #tpu.dot_dimension_numbers<[1], [0], [0], [1], [0, 0, 1, 1], [], []>} : vector<8x128xf32>, vector<128x32xf32>, vector<8x32xf32> -> vector<8x32xf32>
    %c0_26 = arith.constant 0 : index
    %c0_27 = arith.constant 0 : index
    %36 = vector.load %arg9[%c0_26, %c0_27] : memref<32x32xf32, #tpu.memory_space<vmem>>, vector<32x32xf32>
    %cst_28 = arith.constant dense<0.000000e+00> : vector<8x32xf32>
    %37 = tpu.matmul %0, %36, %cst_28 {dimension_numbers = #tpu.dot_dimension_numbers<[1], [0], [0], [1], [0, 0, 1, 1], [], []>} : vector<8x32xf32>, vector<32x32xf32>, vector<8x32xf32> -> vector<8x32xf32>
    %c0_29 = arith.constant 0 : index
    %c0_30 = arith.constant 0 : index
    %38 = vector.load %arg10[%c0_29, %c0_30] : memref<1x32xf32, #tpu.memory_space<vmem>>, vector<1x32xf32>
    %39 = vector.broadcast %38 : vector<1x32xf32> to vector<8x32xf32>
    %40 = arith.addf %37, %39 : vector<8x32xf32>
    %c0_31 = arith.constant 0 : index
    %c0_32 = arith.constant 0 : index
    %41 = vector.load %arg11[%c0_31, %c0_32] : memref<32x32xf32, #tpu.memory_space<vmem>>, vector<32x32xf32>
    %cst_33 = arith.constant dense<0.000000e+00> : vector<8x32xf32>
    %42 = tpu.matmul %35, %41, %cst_33 {dimension_numbers = #tpu.dot_dimension_numbers<[1], [0], [0], [1], [0, 0, 1, 1], [], []>} : vector<8x32xf32>, vector<32x32xf32>, vector<8x32xf32> -> vector<8x32xf32>
    %43 = arith.addf %40, %42 : vector<8x32xf32>
    %44 = math.tanh %43 : vector<8x32xf32>
    %cst_34 = arith.constant 1.000000e+00 : f32
    %45 = vector.broadcast %cst_34 : f32 to vector<8x32xf32>
    %46 = arith.subf %45, %18 : vector<8x32xf32>
    %47 = arith.mulf %46, %5 : vector<8x32xf32>
    %48 = arith.mulf %18, %44 : vector<8x32xf32>
    %49 = arith.addf %47, %48 : vector<8x32xf32>
    %c0_35 = arith.constant 0 : index
    %c0_36 = arith.constant 0 : index
    %50 = vector.load %arg13[%c0_35, %c0_36] : memref<8x32xf32, #tpu.memory_space<vmem>>, vector<8x32xf32>
    tpu.vector_store %arg13[%c0_35, %c0_36], %49 {strides = array<i32>} : memref<8x32xf32, #tpu.memory_space<vmem>>, vector<8x32xf32>,
    return
  }
  func.func @transform_0(%arg0: i32) -> (i32, i32) {
    %c0_i32 = arith.constant 0 : i32
    %c0_i32_0 = arith.constant 0 : i32
    return %arg0, %c0_i32 : i32, i32
  }
  func.func @transform_1(%arg0: i32) -> (i32, i32, i32) {
    %c0_i32 = arith.constant 0 : i32
    %c0_i32_0 = arith.constant 0 : i32
    %c0_i32_1 = arith.constant 0 : i32
    return %c0_i32, %arg0, %c0_i32_0 : i32, i32, i32
  }
  func.func @transform_2(%arg0: i32) -> (i32, i32) {
    %c0_i32 = arith.constant 0 : i32
    %c0_i32_0 = arith.constant 0 : i32
    %c0_i32_1 = arith.constant 0 : i32
    return %c0_i32, %c0_i32_0 : i32, i32
  }
  func.func @transform_3(%arg0: i32) -> (i32, i32) {
    %c0_i32 = arith.constant 0 : i32
    %c0_i32_0 = arith.constant 0 : i32
    %c0_i32_1 = arith.constant 0 : i32
    return %c0_i32, %c0_i32_0 : i32, i32
  }
  func.func @transform_4(%arg0: i32) -> (i32, i32) {
    %c0_i32 = arith.constant 0 : i32
    %c0_i32_0 = arith.constant 0 : i32
    %c0_i32_1 = arith.constant 0 : i32
    return %c0_i32, %c0_i32_0 : i32, i32
  }
  func.func @transform_5(%arg0: i32) -> (i32, i32) {
    %c0_i32 = arith.constant 0 : i32
    %c0_i32_0 = arith.constant 0 : i32
    %c0_i32_1 = arith.constant 0 : i32
    return %c0_i32, %c0_i32_0 : i32, i32
  }
  func.func @transform_6(%arg0: i32) -> (i32, i32) {
    %c0_i32 = arith.constant 0 : i32
    %c0_i32_0 = arith.constant 0 : i32
    %c0_i32_1 = arith.constant 0 : i32
    return %c0_i32, %c0_i32_0 : i32, i32
  }
  func.func @transform_7(%arg0: i32) -> (i32, i32) {
    %c0_i32 = arith.constant 0 : i32
    %c0_i32_0 = arith.constant 0 : i32
    %c0_i32_1 = arith.constant 0 : i32
    return %c0_i32, %c0_i32_0 : i32, i32
  }
  func.func @transform_8(%arg0: i32) -> (i32, i32) {
    %c0_i32 = arith.constant 0 : i32
    %c0_i32_0 = arith.constant 0 : i32
    %c0_i32_1 = arith.constant 0 : i32
    return %c0_i32, %c0_i32_0 : i32, i32
  }
  func.func @transform_9(%arg0: i32) -> (i32, i32) {
    %c0_i32 = arith.constant 0 : i32
    %c0_i32_0 = arith.constant 0 : i32
    %c0_i32_1 = arith.constant 0 : i32
    return %c0_i32, %c0_i32_0 : i32, i32
  }
  func.func @transform_10(%arg0: i32) -> (i32, i32) {
    %c0_i32 = arith.constant 0 : i32
    %c0_i32_0 = arith.constant 0 : i32
    %c0_i32_1 = arith.constant 0 : i32
    return %c0_i32, %c0_i32_0 : i32, i32
  }
  func.func @transform_11(%arg0: i32) -> (i32, i32) {
    %c0_i32 = arith.constant 0 : i32
    %c0_i32_0 = arith.constant 0 : i32
    %c0_i32_1 = arith.constant 0 : i32
    return %c0_i32, %c0_i32_0 : i32, i32
  }
  func.func @transform_12(%arg0: i32) -> (i32, i32) {
    %c0_i32 = arith.constant 0 : i32
    %c0_i32_0 = arith.constant 0 : i32
    return %arg0, %c0_i32 : i32, i32
  }
}

module attributes {stable_mosaic.version = 11 : i64} {
  func.func @_word_kernel(%arg0: i32, %arg1: memref<8x32xf32, #tpu.memory_space<vmem>>, %arg2: memref<8x32xf32, #tpu.memory_space<vmem>>, %arg3: memref<32x32xf32, #tpu.memory_space<vmem>>, %arg4: memref<32x32xf32, #tpu.memory_space<vmem>>, %arg5: memref<1x32xf32, #tpu.memory_space<vmem>>, %arg6: memref<32x128xf32, #tpu.memory_space<vmem>>, %arg7: memref<1x128xf32, #tpu.memory_space<vmem>>, %arg8: memref<8x128xf32, #tpu.memory_space<vmem>>) attributes {dimension_semantics = [#tpu.dimension_semantics<parallel>], iteration_bounds = array<i64: 1>, scalar_prefetch = 0 : i64, scratch_operands = 0 : i64, tpu.core_type = #tpu.core_type<tc>, window_params = [{transform_indices = @transform_0, window_bounds = array<i64: 8, 32>}, {transform_indices = @transform_1, window_bounds = array<i64: 8, 32>}, {pipeline_mode = #tpu.pipeline_mode<synchronous>, transform_indices = @transform_2, window_bounds = array<i64: 32, 32>}, {pipeline_mode = #tpu.pipeline_mode<synchronous>, transform_indices = @transform_3, window_bounds = array<i64: 32, 32>}, {pipeline_mode = #tpu.pipeline_mode<synchronous>, transform_indices = @transform_4, window_bounds = array<i64: 1, 32>}, {pipeline_mode = #tpu.pipeline_mode<synchronous>, transform_indices = @transform_5, window_bounds = array<i64: 32, 128>}, {pipeline_mode = #tpu.pipeline_mode<synchronous>, transform_indices = @transform_6, window_bounds = array<i64: 1, 128>}, {transform_indices = @transform_7, window_bounds = array<i64: 8, 128>}]} {
    %c0 = arith.constant 0 : index
    %c0_0 = arith.constant 0 : index
    %0 = vector.load %arg1[%c0, %c0_0] : memref<8x32xf32, #tpu.memory_space<vmem>>, vector<8x32xf32>
    %c0_1 = arith.constant 0 : index
    %c0_2 = arith.constant 0 : index
    %1 = vector.load %arg3[%c0_1, %c0_2] : memref<32x32xf32, #tpu.memory_space<vmem>>, vector<32x32xf32>
    %cst = arith.constant dense<0.000000e+00> : vector<8x32xf32>
    %2 = tpu.matmul %0, %1, %cst {dimension_numbers = #tpu.dot_dimension_numbers<[1], [0], [0], [1], [0, 0, 1, 1], [], []>} : vector<8x32xf32>, vector<32x32xf32>, vector<8x32xf32> -> vector<8x32xf32>
    %c0_3 = arith.constant 0 : index
    %c0_4 = arith.constant 0 : index
    %3 = vector.load %arg2[%c0_3, %c0_4] : memref<8x32xf32, #tpu.memory_space<vmem>>, vector<8x32xf32>
    %c0_5 = arith.constant 0 : index
    %c0_6 = arith.constant 0 : index
    %4 = vector.load %arg4[%c0_5, %c0_6] : memref<32x32xf32, #tpu.memory_space<vmem>>, vector<32x32xf32>
    %cst_7 = arith.constant dense<0.000000e+00> : vector<8x32xf32>
    %5 = tpu.matmul %3, %4, %cst_7 {dimension_numbers = #tpu.dot_dimension_numbers<[1], [0], [0], [1], [0, 0, 1, 1], [], []>} : vector<8x32xf32>, vector<32x32xf32>, vector<8x32xf32> -> vector<8x32xf32>
    %6 = arith.addf %2, %5 : vector<8x32xf32>
    %c0_8 = arith.constant 0 : index
    %c0_9 = arith.constant 0 : index
    %7 = vector.load %arg5[%c0_8, %c0_9] : memref<1x32xf32, #tpu.memory_space<vmem>>, vector<1x32xf32>
    %8 = vector.broadcast %7 : vector<1x32xf32> to vector<8x32xf32>
    %9 = arith.addf %6, %8 : vector<8x32xf32>
    %cst_10 = arith.constant 0.000000e+00 : f32
    %10 = vector.broadcast %cst_10 : f32 to vector<8x32xf32>
    %11 = arith.maximumf %9, %10 : vector<8x32xf32>
    %c0_11 = arith.constant 0 : index
    %c0_12 = arith.constant 0 : index
    %12 = vector.load %arg6[%c0_11, %c0_12] : memref<32x128xf32, #tpu.memory_space<vmem>>, vector<32x128xf32>
    %cst_13 = arith.constant dense<0.000000e+00> : vector<8x128xf32>
    %13 = tpu.matmul %11, %12, %cst_13 {dimension_numbers = #tpu.dot_dimension_numbers<[1], [0], [0], [1], [0, 0, 1, 1], [], []>} : vector<8x32xf32>, vector<32x128xf32>, vector<8x128xf32> -> vector<8x128xf32>
    %c0_14 = arith.constant 0 : index
    %c0_15 = arith.constant 0 : index
    %14 = vector.load %arg7[%c0_14, %c0_15] : memref<1x128xf32, #tpu.memory_space<vmem>>, vector<1x128xf32>
    %15 = vector.broadcast %14 : vector<1x128xf32> to vector<8x128xf32>
    %16 = arith.addf %13, %15 : vector<8x128xf32>
    %c0_16 = arith.constant 0 : index
    %c0_17 = arith.constant 0 : index
    %17 = vector.load %arg8[%c0_16, %c0_17] : memref<8x128xf32, #tpu.memory_space<vmem>>, vector<8x128xf32>
    tpu.vector_store %arg8[%c0_16, %c0_17], %16 {strides = array<i32>} : memref<8x128xf32, #tpu.memory_space<vmem>>, vector<8x128xf32>,
    return
  }
  func.func @transform_0(%arg0: i32) -> (i32, i32) {
    %c0_i32 = arith.constant 0 : i32
    %c0_i32_0 = arith.constant 0 : i32
    return %arg0, %c0_i32 : i32, i32
  }
  func.func @transform_1(%arg0: i32) -> (i32, i32) {
    %c0_i32 = arith.constant 0 : i32
    %c0_i32_0 = arith.constant 0 : i32
    return %arg0, %c0_i32 : i32, i32
  }
  func.func @transform_2(%arg0: i32) -> (i32, i32) {
    %c0_i32 = arith.constant 0 : i32
    %c0_i32_0 = arith.constant 0 : i32
    %c0_i32_1 = arith.constant 0 : i32
    return %c0_i32, %c0_i32_0 : i32, i32
  }
  func.func @transform_3(%arg0: i32) -> (i32, i32) {
    %c0_i32 = arith.constant 0 : i32
    %c0_i32_0 = arith.constant 0 : i32
    %c0_i32_1 = arith.constant 0 : i32
    return %c0_i32, %c0_i32_0 : i32, i32
  }
  func.func @transform_4(%arg0: i32) -> (i32, i32) {
    %c0_i32 = arith.constant 0 : i32
    %c0_i32_0 = arith.constant 0 : i32
    %c0_i32_1 = arith.constant 0 : i32
    return %c0_i32, %c0_i32_0 : i32, i32
  }
  func.func @transform_5(%arg0: i32) -> (i32, i32) {
    %c0_i32 = arith.constant 0 : i32
    %c0_i32_0 = arith.constant 0 : i32
    %c0_i32_1 = arith.constant 0 : i32
    return %c0_i32, %c0_i32_0 : i32, i32
  }
  func.func @transform_6(%arg0: i32) -> (i32, i32) {
    %c0_i32 = arith.constant 0 : i32
    %c0_i32_0 = arith.constant 0 : i32
    %c0_i32_1 = arith.constant 0 : i32
    return %c0_i32, %c0_i32_0 : i32, i32
  }
  func.func @transform_7(%arg0: i32) -> (i32, i32) {
    %c0_i32 = arith.constant 0 : i32
    %c0_i32_0 = arith.constant 0 : i32
    return %arg0, %c0_i32 : i32, i32
  }
}

module attributes {stable_mosaic.version = 11 : i64} {
  func.func @_stop_kernel(%arg0: i32, %arg1: memref<8x32xf32, #tpu.memory_space<vmem>>, %arg2: memref<1x8x128xf32, #tpu.memory_space<vmem>>, %arg3: memref<8x32xf32, #tpu.memory_space<vmem>>, %arg4: memref<32x32xf32, #tpu.memory_space<vmem>>, %arg5: memref<32x32xf32, #tpu.memory_space<vmem>>, %arg6: memref<1x32xf32, #tpu.memory_space<vmem>>, %arg7: memref<32x32xf32, #tpu.memory_space<vmem>>, %arg8: memref<32x32xf32, #tpu.memory_space<vmem>>, %arg9: memref<1x32xf32, #tpu.memory_space<vmem>>, %arg10: memref<32x128xf32, #tpu.memory_space<vmem>>, %arg11: memref<1x128xf32, #tpu.memory_space<vmem>>, %arg12: memref<128x32xf32, #tpu.memory_space<vmem>>, %arg13: memref<8x128xf32, #tpu.memory_space<vmem>>) attributes {dimension_semantics = [#tpu.dimension_semantics<parallel>], iteration_bounds = array<i64: 2>, scalar_prefetch = 0 : i64, scratch_operands = 0 : i64, tpu.core_type = #tpu.core_type<tc>, window_params = [{transform_indices = @transform_0, window_bounds = array<i64: 8, 32>}, {transform_indices = @transform_1, window_bounds = array<i64: 1, 8, 128>}, {transform_indices = @transform_2, window_bounds = array<i64: 8, 32>}, {pipeline_mode = #tpu.pipeline_mode<synchronous>, transform_indices = @transform_3, window_bounds = array<i64: 32, 32>}, {pipeline_mode = #tpu.pipeline_mode<synchronous>, transform_indices = @transform_4, window_bounds = array<i64: 32, 32>}, {pipeline_mode = #tpu.pipeline_mode<synchronous>, transform_indices = @transform_5, window_bounds = array<i64: 1, 32>}, {pipeline_mode = #tpu.pipeline_mode<synchronous>, transform_indices = @transform_6, window_bounds = array<i64: 32, 32>}, {pipeline_mode = #tpu.pipeline_mode<synchronous>, transform_indices = @transform_7, window_bounds = array<i64: 32, 32>}, {pipeline_mode = #tpu.pipeline_mode<synchronous>, transform_indices = @transform_8, window_bounds = array<i64: 1, 32>}, {pipeline_mode = #tpu.pipeline_mode<synchronous>, transform_indices = @transform_9, window_bounds = array<i64: 32, 128>}, {pipeline_mode = #tpu.pipeline_mode<synchronous>, transform_indices = @transform_10, window_bounds = array<i64: 1, 128>}, {pipeline_mode = #tpu.pipeline_mode<synchronous>, transform_indices = @transform_11, window_bounds = array<i64: 128, 32>}, {transform_indices = @transform_12, window_bounds = array<i64: 8, 128>}]} {
    %c0 = arith.constant 0 : index
    %c0_0 = arith.constant 0 : index
    %0 = vector.load %arg1[%c0, %c0_0] : memref<8x32xf32, #tpu.memory_space<vmem>>, vector<8x32xf32>
    %c0_1 = arith.constant 0 : index
    %c0_2 = arith.constant 0 : index
    %c0_3 = arith.constant 0 : index
    %1 = vector.load %arg2[%c0_1, %c0_2, %c0_3] : memref<1x8x128xf32, #tpu.memory_space<vmem>>, vector<1x8x128xf32>
    %2 = vector.shape_cast %1 : vector<1x8x128xf32> to vector<8x128xf32>
    %c0_4 = arith.constant 0 : index
    %c0_5 = arith.constant 0 : index
    %3 = vector.load %arg12[%c0_4, %c0_5] : memref<128x32xf32, #tpu.memory_space<vmem>>, vector<128x32xf32>
    %cst = arith.constant dense<0.000000e+00> : vector<8x32xf32>
    %4 = tpu.matmul %2, %3, %cst {dimension_numbers = #tpu.dot_dimension_numbers<[1], [0], [0], [1], [0, 0, 1, 1], [], []>} : vector<8x128xf32>, vector<128x32xf32>, vector<8x32xf32> -> vector<8x32xf32>
    %c0_6 = arith.constant 0 : index
    %c0_7 = arith.constant 0 : index
    %5 = vector.load %arg4[%c0_6, %c0_7] : memref<32x32xf32, #tpu.memory_space<vmem>>, vector<32x32xf32>
    %cst_8 = arith.constant dense<0.000000e+00> : vector<8x32xf32>
    %6 = tpu.matmul %0, %5, %cst_8 {dimension_numbers = #tpu.dot_dimension_numbers<[1], [0], [0], [1], [0, 0, 1, 1], [], []>} : vector<8x32xf32>, vector<32x32xf32>, vector<8x32xf32> -> vector<8x32xf32>
    %c0_9 = arith.constant 0 : index
    %c0_10 = arith.constant 0 : index
    %7 = vector.load %arg5[%c0_9, %c0_10] : memref<32x32xf32, #tpu.memory_space<vmem>>, vector<32x32xf32>
    %cst_11 = arith.constant dense<0.000000e+00> : vector<8x32xf32>
    %8 = tpu.matmul %4, %7, %cst_11 {dimension_numbers = #tpu.dot_dimension_numbers<[1], [0], [0], [1], [0, 0, 1, 1], [], []>} : vector<8x32xf32>, vector<32x32xf32>, vector<8x32xf32> -> vector<8x32xf32>
    %9 = arith.addf %6, %8 : vector<8x32xf32>
    %c0_12 = arith.constant 0 : index
    %c0_13 = arith.constant 0 : index
    %10 = vector.load %arg6[%c0_12, %c0_13] : memref<1x32xf32, #tpu.memory_space<vmem>>, vector<1x32xf32>
    %11 = vector.broadcast %10 : vector<1x32xf32> to vector<8x32xf32>
    %12 = arith.addf %9, %11 : vector<8x32xf32>
    %cst_14 = arith.constant 0.000000e+00 : f32
    %13 = vector.broadcast %cst_14 : f32 to vector<8x32xf32>
    %14 = arith.maximumf %12, %13 : vector<8x32xf32>
    %c0_15 = arith.constant 0 : index
    %c0_16 = arith.constant 0 : index
    %15 = vector.load %arg7[%c0_15, %c0_16] : memref<32x32xf32, #tpu.memory_space<vmem>>, vector<32x32xf32>
    %cst_17 = arith.constant dense<0.000000e+00> : vector<8x32xf32>
    %16 = tpu.matmul %14, %15, %cst_17 {dimension_numbers = #tpu.dot_dimension_numbers<[1], [0], [0], [1], [0, 0, 1, 1], [], []>} : vector<8x32xf32>, vector<32x32xf32>, vector<8x32xf32> -> vector<8x32xf32>
    %c0_18 = arith.constant 0 : index
    %c0_19 = arith.constant 0 : index
    %17 = vector.load %arg3[%c0_18, %c0_19] : memref<8x32xf32, #tpu.memory_space<vmem>>, vector<8x32xf32>
    %c0_20 = arith.constant 0 : index
    %c0_21 = arith.constant 0 : index
    %18 = vector.load %arg8[%c0_20, %c0_21] : memref<32x32xf32, #tpu.memory_space<vmem>>, vector<32x32xf32>
    %cst_22 = arith.constant dense<0.000000e+00> : vector<8x32xf32>
    %19 = tpu.matmul %17, %18, %cst_22 {dimension_numbers = #tpu.dot_dimension_numbers<[1], [0], [0], [1], [0, 0, 1, 1], [], []>} : vector<8x32xf32>, vector<32x32xf32>, vector<8x32xf32> -> vector<8x32xf32>
    %20 = arith.addf %16, %19 : vector<8x32xf32>
    %c0_23 = arith.constant 0 : index
    %c0_24 = arith.constant 0 : index
    %21 = vector.load %arg9[%c0_23, %c0_24] : memref<1x32xf32, #tpu.memory_space<vmem>>, vector<1x32xf32>
    %22 = vector.broadcast %21 : vector<1x32xf32> to vector<8x32xf32>
    %23 = arith.addf %20, %22 : vector<8x32xf32>
    %cst_25 = arith.constant 0.000000e+00 : f32
    %24 = vector.broadcast %cst_25 : f32 to vector<8x32xf32>
    %25 = arith.maximumf %23, %24 : vector<8x32xf32>
    %c0_26 = arith.constant 0 : index
    %c0_27 = arith.constant 0 : index
    %26 = vector.load %arg10[%c0_26, %c0_27] : memref<32x128xf32, #tpu.memory_space<vmem>>, vector<32x128xf32>
    %cst_28 = arith.constant dense<0.000000e+00> : vector<8x128xf32>
    %27 = tpu.matmul %25, %26, %cst_28 {dimension_numbers = #tpu.dot_dimension_numbers<[1], [0], [0], [1], [0, 0, 1, 1], [], []>} : vector<8x32xf32>, vector<32x128xf32>, vector<8x128xf32> -> vector<8x128xf32>
    %c0_29 = arith.constant 0 : index
    %c0_30 = arith.constant 0 : index
    %28 = vector.load %arg11[%c0_29, %c0_30] : memref<1x128xf32, #tpu.memory_space<vmem>>, vector<1x128xf32>
    %29 = vector.broadcast %28 : vector<1x128xf32> to vector<8x128xf32>
    %30 = arith.addf %27, %29 : vector<8x128xf32>
    %c0_31 = arith.constant 0 : index
    %c0_32 = arith.constant 0 : index
    %31 = vector.load %arg13[%c0_31, %c0_32] : memref<8x128xf32, #tpu.memory_space<vmem>>, vector<8x128xf32>
    tpu.vector_store %arg13[%c0_31, %c0_32], %30 {strides = array<i32>} : memref<8x128xf32, #tpu.memory_space<vmem>>, vector<8x128xf32>,
    return
  }
  func.func @transform_0(%arg0: i32) -> (i32, i32) {
    %c0_i32 = arith.constant 0 : i32
    %c0_i32_0 = arith.constant 0 : i32
    return %arg0, %c0_i32 : i32, i32
  }
  func.func @transform_1(%arg0: i32) -> (i32, i32, i32) {
    %c0_i32 = arith.constant 0 : i32
    %c0_i32_0 = arith.constant 0 : i32
    %c0_i32_1 = arith.constant 0 : i32
    return %c0_i32, %arg0, %c0_i32_0 : i32, i32, i32
  }
  func.func @transform_2(%arg0: i32) -> (i32, i32) {
    %c0_i32 = arith.constant 0 : i32
    %c0_i32_0 = arith.constant 0 : i32
    return %arg0, %c0_i32 : i32, i32
  }
  func.func @transform_3(%arg0: i32) -> (i32, i32) {
    %c0_i32 = arith.constant 0 : i32
    %c0_i32_0 = arith.constant 0 : i32
    %c0_i32_1 = arith.constant 0 : i32
    return %c0_i32, %c0_i32_0 : i32, i32
  }
  func.func @transform_4(%arg0: i32) -> (i32, i32) {
    %c0_i32 = arith.constant 0 : i32
    %c0_i32_0 = arith.constant 0 : i32
    %c0_i32_1 = arith.constant 0 : i32
    return %c0_i32, %c0_i32_0 : i32, i32
  }
  func.func @transform_5(%arg0: i32) -> (i32, i32) {
    %c0_i32 = arith.constant 0 : i32
    %c0_i32_0 = arith.constant 0 : i32
    %c0_i32_1 = arith.constant 0 : i32
    return %c0_i32, %c0_i32_0 : i32, i32
  }
  func.func @transform_6(%arg0: i32) -> (i32, i32) {
    %c0_i32 = arith.constant 0 : i32
    %c0_i32_0 = arith.constant 0 : i32
    %c0_i32_1 = arith.constant 0 : i32
    return %c0_i32, %c0_i32_0 : i32, i32
  }
  func.func @transform_7(%arg0: i32) -> (i32, i32) {
    %c0_i32 = arith.constant 0 : i32
    %c0_i32_0 = arith.constant 0 : i32
    %c0_i32_1 = arith.constant 0 : i32
    return %c0_i32, %c0_i32_0 : i32, i32
  }
  func.func @transform_8(%arg0: i32) -> (i32, i32) {
    %c0_i32 = arith.constant 0 : i32
    %c0_i32_0 = arith.constant 0 : i32
    %c0_i32_1 = arith.constant 0 : i32
    return %c0_i32, %c0_i32_0 : i32, i32
  }
  func.func @transform_9(%arg0: i32) -> (i32, i32) {
    %c0_i32 = arith.constant 0 : i32
    %c0_i32_0 = arith.constant 0 : i32
    %c0_i32_1 = arith.constant 0 : i32
    return %c0_i32, %c0_i32_0 : i32, i32
  }
  func.func @transform_10(%arg0: i32) -> (i32, i32) {
    %c0_i32 = arith.constant 0 : i32
    %c0_i32_0 = arith.constant 0 : i32
    %c0_i32_1 = arith.constant 0 : i32
    return %c0_i32, %c0_i32_0 : i32, i32
  }
  func.func @transform_11(%arg0: i32) -> (i32, i32) {
    %c0_i32 = arith.constant 0 : i32
    %c0_i32_0 = arith.constant 0 : i32
    %c0_i32_1 = arith.constant 0 : i32
    return %c0_i32, %c0_i32_0 : i32, i32
  }
  func.func @transform_12(%arg0: i32) -> (i32, i32) {
    %c0_i32 = arith.constant 0 : i32
    %c0_i32_0 = arith.constant 0 : i32
    return %arg0, %c0_i32 : i32, i32
  }
}

</mosaic_0001>

<llo_original>
// kernel: _decoder_device.2
$region0: #{_decoder_device.2}
  #allocation0 [shape = 'u32[]', space=smem, size = 0x4, offset = 0x4, fixed_abs, tag = 'smem constant byte address 0x4 - core index']
  #allocation1 [shape = 'u32[144,128]{1,0:T(1,128)}', space=vmem, size = 0x12000, scoped, tag = 'internal scratch']
  %s0 = inlined_call_operand.vmem [shape: f32[8,32], index: 0, kind: input, shape index: {}]
  %s1 = inlined_call_operand.vmem [shape: f32[8,32], index: 1, kind: input, shape index: {}]
  %s2 = inlined_call_operand.vmem [shape: f32[32,32], index: 2, kind: input, shape index: {}]
  %s3 = inlined_call_operand.vmem [shape: f32[32,32], index: 3, kind: input, shape index: {}]
  %s4 = inlined_call_operand.vmem [shape: f32[1,32], index: 4, kind: input, shape index: {}]
  %s5 = inlined_call_operand.vmem [shape: f32[32,128], index: 5, kind: input, shape index: {}]
  %s6 = inlined_call_operand.vmem [shape: f32[1,128], index: 6, kind: input, shape index: {}]
  %s7 = inlined_call_operand.vmem [shape: f32[8,128], index: 7, kind: output, shape index: {}]
  %s8 = sld [smem:[#allocation0]]
  $region38: #{_decoder_device.2} parent=0
    _
  %s10 = ssub.s32 1, %s8
  %s11 = scalar_select 0, %s10, %s8
  // Predicated region
  $region2: #{_decoder_device.2} parent=0 // pred_check
    _
  $region3: #{_decoder_device.2} parent=0 // pred_check_branch
    %13 = sbr.rel (0) target = $region5
  $region4: #{_decoder_device.2} parent=0 // pred_region
    _
  $region5: #{_decoder_device.2} parent=0 // pred_fallthru
    _
  // Predicated region
  $region6: #{_decoder_device.2} parent=0 // pred_check
    _
  $region7: #{_decoder_device.2} parent=0 // pred_check_branch
    %15 = sbr.rel (0) target = $region9
  $region8: #{_decoder_device.2} parent=0 // pred_region
    _
  $region9: #{_decoder_device.2} parent=0 // pred_fallthru
    _
  // Predicated region
  $region10: #{_decoder_device.2} parent=0 // pred_check
    _
  $region11: #{_decoder_device.2} parent=0 // pred_check_branch
    %17 = sbr.rel (0) target = $region13
  $region12: #{_decoder_device.2} parent=0 // pred_region
    _
  $region13: #{_decoder_device.2} parent=0 // pred_fallthru
    _
  // Predicated region
  $region14: #{_decoder_device.2} parent=0 // pred_check
    _
  $region15: #{_decoder_device.2} parent=0 // pred_check_branch
    %19 = sbr.rel (0) target = $region17
  $region16: #{_decoder_device.2} parent=0 // pred_region
    _
  $region17: #{_decoder_device.2} parent=0 // pred_fallthru
    _
  // Predicated region
  $region18: #{_decoder_device.2} parent=0 // pred_check
    _
  $region19: #{_decoder_device.2} parent=0 // pred_check_branch
    %21 = sbr.rel (0) target = $region21
  $region20: #{_decoder_device.2} parent=0 // pred_region
    _
  $region21: #{_decoder_device.2} parent=0 // pred_fallthru
    _
  // Predicated region
  $region22: #{_decoder_device.2} parent=0 // pred_check
    _
  $region23: #{_decoder_device.2} parent=0 // pred_check_branch
    %23 = sbr.rel (0) target = $region25
  $region24: #{_decoder_device.2} parent=0 // pred_region
    _
  $region25: #{_decoder_device.2} parent=0 // pred_fallthru
    _
  // Predicated region
  $region26: #{_decoder_device.2} parent=0 // pred_check
    _
  $region27: #{_decoder_device.2} parent=0 // pred_check_branch
    %25 = sbr.rel (0) target = $region29
  $region28: #{_decoder_device.2} parent=0 // pred_region
    _
  $region29: #{_decoder_device.2} parent=0 // pred_fallthru
    _
  %v26 = vld [vmem:[%s0] sm:$0xff]
  %v27 = vld [vmem:[%s2] sm:$0xff]
  %v28 = vld [vmem:[%s2 + $0x8] sm:$0xff]
  %v29 = vld [vmem:[%s2 + $0x10] sm:$0xff]
  %v30 = vld [vmem:[%s2 + $0x18] sm:$0xff]
  %v31 = vld [vmem:[%s1] sm:$0xff]
  %v32 = vld [vmem:[%s3] sm:$0xff]
  %v33 = vld [vmem:[%s3 + $0x8] sm:$0xff]
  %v34 = vld [vmem:[%s3 + $0x10] sm:$0xff]
  %v35 = vld [vmem:[%s3 + $0x18] sm:$0xff]
  %vm36 = vcmask 261120
  %v38 = vsel %vm36, %v31, 0
  %40 = vmatprep.subr.mxu0 0.0
  %41 = vmatpush1.msra.mxu0 %v32
  %42 = vmatprep.subr.mxu0 0.0
  %43 = vmatpush1.msra.mxu0 %v33
  %44 = vmatprep.subr.mxu0 0.0
  %45 = vmatpush1.msra.mxu0 %v34
  %46 = vmatprep.subr.mxu0 0.0
  %47 = vmatpush1.msra.mxu0 %v35
  %48 = vmatprep.subr.mxu0 0.0
  %49 = vmatpush1.msra.mxu0 0.0
  %50 = vmatprep.subr.mxu0 0.0
  %51 = vmatpush1.msra.mxu0 0.0
  %52 = vmatprep.subr.mxu0 0.0
  %53 = vmatpush1.msra.mxu0 0.0
  %54 = vmatprep.subr.mxu0 0.0
  %55 = vmatpush1.msra.mxu0 0.0
  %56 = vmatprep.subr.mxu0 0.0
  %57 = vmatpush1.msra.mxu0 0.0
  %58 = vmatprep.subr.mxu0 0.0
  %59 = vmatpush1.msra.mxu0 0.0
  %60 = vmatprep.subr.mxu0 0.0
  %61 = vmatpush1.msra.mxu0 0.0
  %62 = vmatprep.subr.mxu0 0.0
  %63 = vmatpush1.msra.mxu0 0.0
  %64 = vmatprep.subr.mxu0 0.0
  %65 = vmatpush1.msra.mxu0 0.0
  %66 = vmatprep.subr.mxu0 0.0
  %67 = vmatpush1.msra.mxu0 0.0
  %68 = vmatprep.subr.mxu0 0.0
  %69 = vmatpush1.msra.mxu0 0.0
  %70 = vmatprep.subr.mxu0 0.0
  %71 = vmatpush1.msra.mxu0 0.0
  %72 = vmatprep.subr.mxu0 0.0
  %73 = vmatpush1.msra.mxu0 0.0
  %74 = vmatprep.subr.mxu0 0.0
  %75 = vmatpush1.msra.mxu0 0.0
  %76 = vmatprep.subr.mxu0 0.0
  %77 = vmatpush1.msra.mxu0 0.0
  %78 = vmatprep.subr.mxu0 0.0
  %79 = vmatpush1.msra.mxu0 0.0
  %80 = vmatprep.subr.mxu0 0.0
  %81 = vmatpush1.msra.mxu0 0.0
  %82 = vmatprep.subr.mxu0 0.0
  %83 = vmatpush1.msra.mxu0 0.0
  %84 = vmatprep.subr.mxu0 0.0
  %85 = vmatpush1.msra.mxu0 0.0
  %86 = vmatprep.subr.mxu0 0.0
  %87 = vmatpush1.msra.mxu0 0.0
  %88 = vmatprep.subr.mxu0 0.0
  %89 = vmatpush1.msra.mxu0 0.0
  %90 = vmatprep.subr.mxu0 0.0
  %91 = vmatpush1.msra.mxu0 0.0
  %92 = vmatprep.subr.mxu0 0.0
  %93 = vmatpush1.msra.mxu0 0.0
  %94 = vmatprep.subr.mxu0 0.0
  %95 = vmatpush1.msra.mxu0 0.0
  %96 = vmatprep.subr.mxu0 0.0
  %97 = vmatpush1.msra.mxu0 0.0
  %98 = vmatprep.subr.mxu0 0.0
  %99 = vmatpush1.msra.mxu0 0.0
  %100 = vmatprep.subr.mxu0 0.0
  %101 = vmatpush1.msra.mxu0 0.0
  %102 = vmatprep.subr.mxu0 0.0
  %103 = vmatpush1.msra.mxu0 0.0
  %104 = vmatprep.mubr.f32.mxu0 0.0
  %105 = vmatmul.mubr.f32.gmra.mrb[0].mxu0 %v38
  %v106 = vpop.f32.mrb[0].mxu0
  %v107 = vadd.f32 0.0, %v106
  %v108 = vpop.f32.mrb[0].mxu0
  %109 = vdwg.mxu0
  %v111 = vsel %vm36, %v26, 0
  %113 = vmatprep.subr.mxu0 0.0
  %114 = vmatpush1.msra.mxu0 %v27
  %115 = vmatprep.subr.mxu0 0.0
  %116 = vmatpush1.msra.mxu0 %v28
  %117 = vmatprep.subr.mxu0 0.0
  %118 = vmatpush1.msra.mxu0 %v29
  %119 = vmatprep.subr.mxu0 0.0
  %120 = vmatpush1.msra.mxu0 %v30
  %121 = vmatprep.subr.mxu0 0.0
  %122 = vmatpush1.msra.mxu0 0.0
  %123 = vmatprep.subr.mxu0 0.0
  %124 = vmatpush1.msra.mxu0 0.0
  %125 = vmatprep.subr.mxu0 0.0
  %126 = vmatpush1.msra.mxu0 0.0
  %127 = vmatprep.subr.mxu0 0.0
  %128 = vmatpush1.msra.mxu0 0.0
  %129 = vmatprep.subr.mxu0 0.0
  %130 = vmatpush1.msra.mxu0 0.0
  %131 = vmatprep.subr.mxu0 0.0
  %132 = vmatpush1.msra.mxu0 0.0
  %133 = vmatprep.subr.mxu0 0.0
  %134 = vmatpush1.msra.mxu0 0.0
  %135 = vmatprep.subr.mxu0 0.0
  %136 = vmatpush1.msra.mxu0 0.0
  %137 = vmatprep.subr.mxu0 0.0
  %138 = vmatpush1.msra.mxu0 0.0
  %139 = vmatprep.subr.mxu0 0.0
  %140 = vmatpush1.msra.mxu0 0.0
  %141 = vmatprep.subr.mxu0 0.0
  %142 = vmatpush1.msra.mxu0 0.0
  %143 = vmatprep.subr.mxu0 0.0
  %144 = vmatpush1.msra.mxu0 0.0
  %145 = vmatprep.subr.mxu0 0.0
  %146 = vmatpush1.msra.mxu0 0.0
  %147 = vmatprep.subr.mxu0 0.0
  %148 = vmatpush1.msra.mxu0 0.0
  %149 = vmatprep.subr.mxu0 0.0
  %150 = vmatpush1.msra.mxu0 0.0
  %151 = vmatprep.subr.mxu0 0.0
  %152 = vmatpush1.msra.mxu0 0.0
  %153 = vmatprep.subr.mxu0 0.0
  %154 = vmatpush1.msra.mxu0 0.0
  %155 = vmatprep.subr.mxu0 0.0
  %156 = vmatpush1.msra.mxu0 0.0
  %157 = vmatprep.subr.mxu0 0.0
  %158 = vmatpush1.msra.mxu0 0.0
  %159 = vmatprep.subr.mxu0 0.0
  %160 = vmatpush1.msra.mxu0 0.0
  %161 = vmatprep.subr.mxu0 0.0
  %162 = vmatpush1.msra.mxu0 0.0
  %163 = vmatprep.subr.mxu0 0.0
  %164 = vmatpush1.msra.mxu0 0.0
  %165 = vmatprep.subr.mxu0 0.0
  %166 = vmatpush1.msra.mxu0 0.0
  %167 = vmatprep.subr.mxu0 0.0
  %168 = vmatpush1.msra.mxu0 0.0
  %169 = vmatprep.subr.mxu0 0.0
  %170 = vmatpush1.msra.mxu0 0.0
  %171 = vmatprep.subr.mxu0 0.0
  %172 = vmatpush1.msra.mxu0 0.0
  %173 = vmatprep.subr.mxu0 0.0
  %174 = vmatpush1.msra.mxu0 0.0
  %175 = vmatprep.subr.mxu0 0.0
  %176 = vmatpush1.msra.mxu0 0.0
  %177 = vmatprep.mubr.f32.mxu0 0.0
  %178 = vmatmul.mubr.f32.gmra.mrb[0].mxu0 %v111
  %v179 = vpop.f32.mrb[0].mxu0
  %v180 = vadd.f32 %v107, %v179
  %v181 = vpop.f32.mrb[0].mxu0
  %182 = vdwg.mxu0
  %v183 = vld [vmem:[%s4] sm:$0x1]
  %v185 = vlaneseq
  %v186 = vshrl.u32 %v185, 7
  %v187 = vsub.s32 0, %v186
  %v188 = vrot.slane %v183, %v187
  %v190 = vadd.f32 %v180, %v188
  %v191 = vmax.f32 %v190, 0.0
  %v192 = vld [vmem:[%s5] sm:$0xff]
  %v193 = vld [vmem:[%s5 + $0x8] sm:$0xff]
  %v194 = vld [vmem:[%s5 + $0x10] sm:$0xff]
  %v195 = vld [vmem:[%s5 + $0x18] sm:$0xff]
  %v196 = vld [vmem:[%s6] sm:$0x1]
  %v198 = vlaneseq
  %v199 = vshrl.u32 %v198, 7
  %v200 = vsub.s32 0, %v199
  %v201 = vrot.slane %v196, %v200
  %v204 = vsel %vm36, %v191, 0
  %206 = vmatprep.subr.mxu0 0.0
  %207 = vmatpush1.msra.mxu0 %v192
  %208 = vmatprep.subr.mxu0 0.0
  %209 = vmatpush1.msra.mxu0 %v193
  %210 = vmatprep.subr.mxu0 0.0
  %211 = vmatpush1.msra.mxu0 %v194
  %212 = vmatprep.subr.mxu0 0.0
  %213 = vmatpush1.msra.mxu0 %v195
  %214 = vmatprep.subr.mxu0 0.0
  %215 = vmatpush1.msra.mxu0 0.0
  %216 = vmatprep.subr.mxu0 0.0
  %217 = vmatpush1.msra.mxu0 0.0
  %218 = vmatprep.subr.mxu0 0.0
  %219 = vmatpush1.msra.mxu0 0.0
  %220 = vmatprep.subr.mxu0 0.0
  %221 = vmatpush1.msra.mxu0 0.0
  %222 = vmatprep.subr.mxu0 0.0
  %223 = vmatpush1.msra.mxu0 0.0
  %224 = vmatprep.subr.mxu0 0.0
  %225 = vmatpush1.msra.mxu0 0.0
  %226 = vmatprep.subr.mxu0 0.0
  %227 = vmatpush1.msra.mxu0 0.0
  %228 = vmatprep.subr.mxu0 0.0
  %229 = vmatpush1.msra.mxu0 0.0
  %230 = vmatprep.subr.mxu0 0.0
  %231 = vmatpush1.msra.mxu0 0.0
  %232 = vmatprep.subr.mxu0 0.0
  %233 = vmatpush1.msra.mxu0 0.0
  %234 = vmatprep.subr.mxu0 0.0
  %235 = vmatpush1.msra.mxu0 0.0
  %236 = vmatprep.subr.mxu0 0.0
  %237 = vmatpush1.msra.mxu0 0.0
  %238 = vmatprep.subr.mxu0 0.0
  %239 = vmatpush1.msra.mxu0 0.0
  %240 = vmatprep.subr.mxu0 0.0
  %241 = vmatpush1.msra.mxu0 0.0
  %242 = vmatprep.subr.mxu0 0.0
  %243 = vmatpush1.msra.mxu0 0.0
  %244 = vmatprep.subr.mxu0 0.0
  %245 = vmatpush1.msra.mxu0 0.0
  %246 = vmatprep.subr.mxu0 0.0
  %247 = vmatpush1.msra.mxu0 0.0
  %248 = vmatprep.subr.mxu0 0.0
  %249 = vmatpush1.msra.mxu0 0.0
  %250 = vmatprep.subr.mxu0 0.0
  %251 = vmatpush1.msra.mxu0 0.0
  %252 = vmatprep.subr.mxu0 0.0
  %253 = vmatpush1.msra.mxu0 0.0
  %254 = vmatprep.subr.mxu0 0.0
  %255 = vmatpush1.msra.mxu0 0.0
  %256 = vmatprep.subr.mxu0 0.0
  %257 = vmatpush1.msra.mxu0 0.0
  %258 = vmatprep.subr.mxu0 0.0
  %259 = vmatpush1.msra.mxu0 0.0
  %260 = vmatprep.subr.mxu0 0.0
  %261 = vmatpush1.msra.mxu0 0.0
  %262 = vmatprep.subr.mxu0 0.0
  %263 = vmatpush1.msra.mxu0 0.0
  %264 = vmatprep.subr.mxu0 0.0
  %265 = vmatpush1.msra.mxu0 0.0
  %266 = vmatprep.subr.mxu0 0.0
  %267 = vmatpush1.msra.mxu0 0.0
  %268 = vmatprep.subr.mxu0 0.0
  %269 = vmatpush1.msra.mxu0 0.0
  %270 = vmatprep.mubr.f32.mxu0 0.0
  %271 = vmatmul.mubr.f32.gmra.mrb[0].mxu0 %v204
  %v272 = vpop.f32.mrb[0].mxu0
  %v273 = vadd.f32 %v201, %v272
  %v274 = vpop.f32.mrb[0].mxu0
  %275 = vdwg.mxu0
  %276 = vst [vmem:[%s7] sm:$0xff] %v273
  // Predicated region
  $region30: #{_decoder_device.2} parent=0 // pred_check
    _
  $region31: #{_decoder_device.2} parent=0 // pred_check_branch
    %278 = sbr.rel (0) target = $region33
  $region32: #{_decoder_device.2} parent=0 // pred_region
    _
  $region33: #{_decoder_device.2} parent=0 // pred_fallthru
    _
  // Predicated region
  $region34: #{_decoder_device.2} parent=0 // pred_check
    _
  $region35: #{_decoder_device.2} parent=0 // pred_check_branch
    %280 = sbr.rel (0) target = $region37
  $region36: #{_decoder_device.2} parent=0 // pred_region
    _
  $region37: #{_decoder_device.2} parent=0 // pred_fallthru
    _

// kernel: closed_call.4
$region0: #{closed_call.4}
  #allocation0 [shape = 'u32[]', space=smem, size = 0x4, offset = 0x4, fixed_abs, tag = 'smem constant byte address 0x4 - core index']
  #allocation1 [shape = 'u32[144,128]{1,0:T(1,128)}', space=vmem, size = 0x12000, scoped, tag = 'internal scratch']
  %s0 = inlined_call_operand.vmem [shape: f32[8,32], index: 0, kind: input, shape index: {}]
  %s1 = inlined_call_operand.vmem [shape: f32[1,8,128], index: 1, kind: input, shape index: {}]
  %s2 = inlined_call_operand.vmem [shape: f32[32,32], index: 2, kind: input, shape index: {}]
  %s3 = inlined_call_operand.vmem [shape: f32[32,32], index: 3, kind: input, shape index: {}]
  %s4 = inlined_call_operand.vmem [shape: f32[1,32], index: 4, kind: input, shape index: {}]
  %s5 = inlined_call_operand.vmem [shape: f32[32,128], index: 5, kind: input, shape index: {}]
  %s6 = inlined_call_operand.vmem [shape: f32[1,128], index: 6, kind: input, shape index: {}]
  %s7 = inlined_call_operand.vmem [shape: f32[128,128], index: 7, kind: input, shape index: {}]
  %s8 = inlined_call_operand.vmem [shape: f32[32,32], index: 8, kind: input, shape index: {}]
  %s9 = inlined_call_operand.vmem [shape: f32[1,32], index: 9, kind: input, shape index: {}]
  %s10 = inlined_call_operand.vmem [shape: f32[32,32], index: 10, kind: input, shape index: {}]
  %s11 = inlined_call_operand.vmem [shape: f32[128,32], index: 11, kind: input, shape index: {}]
  %s12 = inlined_call_operand.vmem [shape: f32[8,32], index: 12, kind: output, shape index: {}]
  %s13 = sld [smem:[#allocation0]]
  $region58: #{closed_call.4} parent=0
    _
  %s15 = ssub.s32 1, %s13
  %s16 = scalar_select 0, %s15, %s13
  // Predicated region
  $region2: #{closed_call.4} parent=0 // pred_check
    _
  $region3: #{closed_call.4} parent=0 // pred_check_branch
    %18 = sbr.rel (0) target = $region5
  $region4: #{closed_call.4} parent=0 // pred_region
    _
  $region5: #{closed_call.4} parent=0 // pred_fallthru
    _
  // Predicated region
  $region6: #{closed_call.4} parent=0 // pred_check
    _
  $region7: #{closed_call.4} parent=0 // pred_check_branch
    %20 = sbr.rel (0) target = $region9
  $region8: #{closed_call.4} parent=0 // pred_region
    _
  $region9: #{closed_call.4} parent=0 // pred_fallthru
    _
  // Predicated region
  $region10: #{closed_call.4} parent=0 // pred_check
    _
  $region11: #{closed_call.4} parent=0 // pred_check_branch
    %22 = sbr.rel (0) target = $region13
  $region12: #{closed_call.4} parent=0 // pred_region
    _
  $region13: #{closed_call.4} parent=0 // pred_fallthru
    _
  // Predicated region
  $region14: #{closed_call.4} parent=0 // pred_check
    _
  $region15: #{closed_call.4} parent=0 // pred_check_branch
    %24 = sbr.rel (0) target = $region17
  $region16: #{closed_call.4} parent=0 // pred_region
    _
  $region17: #{closed_call.4} parent=0 // pred_fallthru
    _
  // Predicated region
  $region18: #{closed_call.4} parent=0 // pred_check
    _
  $region19: #{closed_call.4} parent=0 // pred_check_branch
    %26 = sbr.rel (0) target = $region21
  $region20: #{closed_call.4} parent=0 // pred_region
    _
  $region21: #{closed_call.4} parent=0 // pred_fallthru
    _
  // Predicated region
  $region22: #{closed_call.4} parent=0 // pred_check
    _
  $region23: #{closed_call.4} parent=0 // pred_check_branch
    %28 = sbr.rel (0) target = $region25
  $region24: #{closed_call.4} parent=0 // pred_region
    _
  $region25: #{closed_call.4} parent=0 // pred_fallthru
    _
  // Predicated region
  $region26: #{closed_call.4} parent=0 // pred_check
    _
  $region27: #{closed_call.4} parent=0 // pred_check_branch
    %30 = sbr.rel (0) target = $region29
  $region28: #{closed_call.4} parent=0 // pred_region
    _
  $region29: #{closed_call.4} parent=0 // pred_fallthru
    _
  // Predicated region
  $region30: #{closed_call.4} parent=0 // pred_check
    _
  $region31: #{closed_call.4} parent=0 // pred_check_branch
    %32 = sbr.rel (0) target = $region33
  $region32: #{closed_call.4} parent=0 // pred_region
    _
  $region33: #{closed_call.4} parent=0 // pred_fallthru
    _
  // Predicated region
  $region34: #{closed_call.4} parent=0 // pred_check
    _
  $region35: #{closed_call.4} parent=0 // pred_check_branch
    %34 = sbr.rel (0) target = $region37
  $region36: #{closed_call.4} parent=0 // pred_region
    _
  $region37: #{closed_call.4} parent=0 // pred_fallthru
    _
  // Predicated region
  $region38: #{closed_call.4} parent=0 // pred_check
    _
  $region39: #{closed_call.4} parent=0 // pred_check_branch
    %36 = sbr.rel (0) target = $region41
  $region40: #{closed_call.4} parent=0 // pred_region
    _
  $region41: #{closed_call.4} parent=0 // pred_fallthru
    _
  // Predicated region
  $region42: #{closed_call.4} parent=0 // pred_check
    _
  $region43: #{closed_call.4} parent=0 // pred_check_branch
    %38 = sbr.rel (0) target = $region45
  $region44: #{closed_call.4} parent=0 // pred_region
    _
  $region45: #{closed_call.4} parent=0 // pred_fallthru
    _
  // Predicated region
  $region46: #{closed_call.4} parent=0 // pred_check
    _
  $region47: #{closed_call.4} parent=0 // pred_check_branch
    %40 = sbr.rel (0) target = $region49
  $region48: #{closed_call.4} parent=0 // pred_region
    _
  $region49: #{closed_call.4} parent=0 // pred_fallthru
    _
  %v41 = vld [vmem:[%s0] sm:$0xff]
  %v42 = vld [vmem:[%s1] sm:$0xff]
  %v43 = vld [vmem:[%s11] sm:$0xff]
  %v44 = vld [vmem:[%s11 + $0x8] sm:$0xff]
  %v45 = vld [vmem:[%s11 + $0x10] sm:$0xff]
  %v46 = vld [vmem:[%s11 + $0x18] sm:$0xff]
  %v47 = vld [vmem:[%s11 + $0x20] sm:$0xff]
  %v48 = vld [vmem:[%s11 + $0x28] sm:$0xff]
  %v49 = vld [vmem:[%s11 + $0x30] sm:$0xff]
  %v50 = vld [vmem:[%s11 + $0x38] sm:$0xff]
  %v51 = vld [vmem:[%s11 + $0x40] sm:$0xff]
  %v52 = vld [vmem:[%s11 + $0x48] sm:$0xff]
  %v53 = vld [vmem:[%s11 + $0x50] sm:$0xff]
  %v54 = vld [vmem:[%s11 + $0x58] sm:$0xff]
  %v55 = vld [vmem:[%s11 + $0x60] sm:$0xff]
  %v56 = vld [vmem:[%s11 + $0x68] sm:$0xff]
  %v57 = vld [vmem:[%s11 + $0x70] sm:$0xff]
  %v58 = vld [vmem:[%s11 + $0x78] sm:$0xff]
  %59 = vmatprep.subr.mxu0 0.0
  %60 = vmatpush1.msra.mxu0 %v43
  %61 = vmatprep.subr.mxu0 0.0
  %62 = vmatpush1.msra.mxu0 %v44
  %63 = vmatprep.subr.mxu0 0.0
  %64 = vmatpush1.msra.mxu0 %v45
  %65 = vmatprep.subr.mxu0 0.0
  %66 = vmatpush1.msra.mxu0 %v46
  %67 = vmatprep.subr.mxu0 0.0
  %68 = vmatpush1.msra.mxu0 %v47
  %69 = vmatprep.subr.mxu0 0.0
  %70 = vmatpush1.msra.mxu0 %v48
  %71 = vmatprep.subr.mxu0 0.0
  %72 = vmatpush1.msra.mxu0 %v49
  %73 = vmatprep.subr.mxu0 0.0
  %74 = vmatpush1.msra.mxu0 %v50
  %75 = vmatprep.subr.mxu0 0.0
  %76 = vmatpush1.msra.mxu0 %v51
  %77 = vmatprep.subr.mxu0 0.0
  %78 = vmatpush1.msra.mxu0 %v52
  %79 = vmatprep.subr.mxu0 0.0
  %80 = vmatpush1.msra.mxu0 %v53
  %81 = vmatprep.subr.mxu0 0.0
  %82 = vmatpush1.msra.mxu0 %v54
  %83 = vmatprep.subr.mxu0 0.0
  %84 = vmatpush1.msra.mxu0 %v55
  %85 = vmatprep.subr.mxu0 0.0
  %86 = vmatpush1.msra.mxu0 %v56
  %87 = vmatprep.subr.mxu0 0.0
  %88 = vmatpush1.msra.mxu0 %v57
  %89 = vmatprep.subr.mxu0 0.0
  %90 = vmatpush1.msra.mxu0 %v58
  %91 = vmatprep.subr.mxu0 0.0
  %92 = vmatpush1.msra.mxu0 0.0
  %93 = vmatprep.subr.mxu0 0.0
  %94 = vmatpush1.msra.mxu0 0.0
  %95 = vmatprep.subr.mxu0 0.0
  %96 = vmatpush1.msra.mxu0 0.0
  %97 = vmatprep.subr.mxu0 0.0
  %98 = vmatpush1.msra.mxu0 0.0
  %99 = vmatprep.subr.mxu0 0.0
  %100 = vmatpush1.msra.mxu0 0.0
  %101 = vmatprep.subr.mxu0 0.0
  %102 = vmatpush1.msra.mxu0 0.0
  %103 = vmatprep.subr.mxu0 0.0
  %104 = vmatpush1.msra.mxu0 0.0
  %105 = vmatprep.subr.mxu0 0.0
  %106 = vmatpush1.msra.mxu0 0.0
  %107 = vmatprep.subr.mxu0 0.0
  %108 = vmatpush1.msra.mxu0 0.0
  %109 = vmatprep.subr.mxu0 0.0
  %110 = vmatpush1.msra.mxu0 0.0
  %111 = vmatprep.subr.mxu0 0.0
  %112 = vmatpush1.msra.mxu0 0.0
  %113 = vmatprep.subr.mxu0 0.0
  %114 = vmatpush1.msra.mxu0 0.0
  %115 = vmatprep.subr.mxu0 0.0
  %116 = vmatpush1.msra.mxu0 0.0
  %117 = vmatprep.subr.mxu0 0.0
  %118 = vmatpush1.msra.mxu0 0.0
  %119 = vmatprep.subr.mxu0 0.0
  %120 = vmatpush1.msra.mxu0 0.0
  %121 = vmatprep.subr.mxu0 0.0
  %122 = vmatpush1.msra.mxu0 0.0
  %123 = vmatprep.mubr.f32.mxu0 0.0
  %124 = vmatmul.mubr.f32.gmra.mrb[0].mxu0 %v42
  %v125 = vpop.f32.mrb[0].mxu0
  %v126 = vadd.f32 0.0, %v125
  %v127 = vpop.f32.mrb[0].mxu0
  %128 = vdwg.mxu0
  %v129 = vld [vmem:[%s2] sm:$0xff]
  %v130 = vld [vmem:[%s2 + $0x8] sm:$0xff]
  %v131 = vld [vmem:[%s2 + $0x10] sm:$0xff]
  %v132 = vld [vmem:[%s2 + $0x18] sm:$0xff]
  %v133 = vld [vmem:[%s3] sm:$0xff]
  %v134 = vld [vmem:[%s3 + $0x8] sm:$0xff]
  %v135 = vld [vmem:[%s3 + $0x10] sm:$0xff]
  %v136 = vld [vmem:[%s3 + $0x18] sm:$0xff]
  %vm137 = vcmask 261120
  %v139 = vsel %vm137, %v126, 0
  %141 = vmatprep.subr.mxu0 0.0
  %142 = vmatpush1.msra.mxu0 %v133
  %143 = vmatprep.subr.mxu0 0.0
  %144 = vmatpush1.msra.mxu0 %v134
  %145 = vmatprep.subr.mxu0 0.0
  %146 = vmatpush1.msra.mxu0 %v135
  %147 = vmatprep.subr.mxu0 0.0
  %148 = vmatpush1.msra.mxu0 %v136
  %149 = vmatprep.subr.mxu0 0.0
  %150 = vmatpush1.msra.mxu0 0.0
  %151 = vmatprep.subr.mxu0 0.0
  %152 = vmatpush1.msra.mxu0 0.0
  %153 = vmatprep.subr.mxu0 0.0
  %154 = vmatpush1.msra.mxu0 0.0
  %155 = vmatprep.subr.mxu0 0.0
  %156 = vmatpush1.msra.mxu0 0.0
  %157 = vmatprep.subr.mxu0 0.0
  %158 = vmatpush1.msra.mxu0 0.0
  %159 = vmatprep.subr.mxu0 0.0
  %160 = vmatpush1.msra.mxu0 0.0
  %161 = vmatprep.subr.mxu0 0.0
  %162 = vmatpush1.msra.mxu0 0.0
  %163 = vmatprep.subr.mxu0 0.0
  %164 = vmatpush1.msra.mxu0 0.0
  %165 = vmatprep.subr.mxu0 0.0
  %166 = vmatpush1.msra.mxu0 0.0
  %167 = vmatprep.subr.mxu0 0.0
  %168 = vmatpush1.msra.mxu0 0.0
  %169 = vmatprep.subr.mxu0 0.0
  %170 = vmatpush1.msra.mxu0 0.0
  %171 = vmatprep.subr.mxu0 0.0
  %172 = vmatpush1.msra.mxu0 0.0
  %173 = vmatprep.subr.mxu0 0.0
  %174 = vmatpush1.msra.mxu0 0.0
  %175 = vmatprep.subr.mxu0 0.0
  %176 = vmatpush1.msra.mxu0 0.0
  %177 = vmatprep.subr.mxu0 0.0
  %178 = vmatpush1.msra.mxu0 0.0
  %179 = vmatprep.subr.mxu0 0.0
  %180 = vmatpush1.msra.mxu0 0.0
  %181 = vmatprep.subr.mxu0 0.0
  %182 = vmatpush1.msra.mxu0 0.0
  %183 = vmatprep.subr.mxu0 0.0
  %184 = vmatpush1.msra.mxu0 0.0
  %185 = vmatprep.subr.mxu0 0.0
  %186 = vmatpush1.msra.mxu0 0.0
  %187 = vmatprep.subr.mxu0 0.0
  %188 = vmatpush1.msra.mxu0 0.0
  %189 = vmatprep.subr.mxu0 0.0
  %190 = vmatpush1.msra.mxu0 0.0
  %191 = vmatprep.subr.mxu0 0.0
  %192 = vmatpush1.msra.mxu0 0.0
  %193 = vmatprep.subr.mxu0 0.0
  %194 = vmatpush1.msra.mxu0 0.0
  %195 = vmatprep.subr.mxu0 0.0
  %196 = vmatpush1.msra.mxu0 0.0
  %197 = vmatprep.subr.mxu0 0.0
  %198 = vmatpush1.msra.mxu0 0.0
  %199 = vmatprep.subr.mxu0 0.0
  %200 = vmatpush1.msra.mxu0 0.0
  %201 = vmatprep.subr.mxu0 0.0
  %202 = vmatpush1.msra.mxu0 0.0
  %203 = vmatprep.subr.mxu0 0.0
  %204 = vmatpush1.msra.mxu0 0.0
  %205 = vmatprep.mubr.f32.mxu0 0.0
  %206 = vmatmul.mubr.f32.gmra.mrb[0].mxu0 %v139
  %v207 = vpop.f32.mrb[0].mxu0
  %v208 = vadd.f32 0.0, %v207
  %v209 = vpop.f32.mrb[0].mxu0
  %210 = vdwg.mxu0
  %v212 = vsel %vm137, %v41, 0
  %214 = vmatprep.subr.mxu0 0.0
  %215 = vmatpush1.msra.mxu0 %v129
  %216 = vmatprep.subr.mxu0 0.0
  %217 = vmatpush1.msra.mxu0 %v130
  %218 = vmatprep.subr.mxu0 0.0
  %219 = vmatpush1.msra.mxu0 %v131
  %220 = vmatprep.subr.mxu0 0.0
  %221 = vmatpush1.msra.mxu0 %v132
  %222 = vmatprep.subr.mxu0 0.0
  %223 = vmatpush1.msra.mxu0 0.0
  %224 = vmatprep.subr.mxu0 0.0
  %225 = vmatpush1.msra.mxu0 0.0
  %226 = vmatprep.subr.mxu0 0.0
  %227 = vmatpush1.msra.mxu0 0.0
  %228 = vmatprep.subr.mxu0 0.0
  %229 = vmatpush1.msra.mxu0 0.0
  %230 = vmatprep.subr.mxu0 0.0
  %231 = vmatpush1.msra.mxu0 0.0
  %232 = vmatprep.subr.mxu0 0.0
  %233 = vmatpush1.msra.mxu0 0.0
  %234 = vmatprep.subr.mxu0 0.0
  %235 = vmatpush1.msra.mxu0 0.0
  %236 = vmatprep.subr.mxu0 0.0
  %237 = vmatpush1.msra.mxu0 0.0
  %238 = vmatprep.subr.mxu0 0.0
  %239 = vmatpush1.msra.mxu0 0.0
  %240 = vmatprep.subr.mxu0 0.0
  %241 = vmatpush1.msra.mxu0 0.0
  %242 = vmatprep.subr.mxu0 0.0
  %243 = vmatpush1.msra.mxu0 0.0
  %244 = vmatprep.subr.mxu0 0.0
  %245 = vmatpush1.msra.mxu0 0.0
  %246 = vmatprep.subr.mxu0 0.0
  %247 = vmatpush1.msra.mxu0 0.0
  %248 = vmatprep.subr.mxu0 0.0
  %249 = vmatpush1.msra.mxu0 0.0
  %250 = vmatprep.subr.mxu0 0.0
  %251 = vmatpush1.msra.mxu0 0.0
  %252 = vmatprep.subr.mxu0 0.0
  %253 = vmatpush1.msra.mxu0 0.0
  %254 = vmatprep.subr.mxu0 0.0
  %255 = vmatpush1.msra.mxu0 0.0
  %256 = vmatprep.subr.mxu0 0.0
  %257 = vmatpush1.msra.mxu0 0.0
  %258 = vmatprep.subr.mxu0 0.0
  %259 = vmatpush1.msra.mxu0 0.0
  %260 = vmatprep.subr.mxu0 0.0
  %261 = vmatpush1.msra.mxu0 0.0
  %262 = vmatprep.subr.mxu0 0.0
  %263 = vmatpush1.msra.mxu0 0.0
  %264 = vmatprep.subr.mxu0 0.0
  %265 = vmatpush1.msra.mxu0 0.0
  %266 = vmatprep.subr.mxu0 0.0
  %267 = vmatpush1.msra.mxu0 0.0
  %268 = vmatprep.subr.mxu0 0.0
  %269 = vmatpush1.msra.mxu0 0.0
  %270 = vmatprep.subr.mxu0 0.0
  %271 = vmatpush1.msra.mxu0 0.0
  %272 = vmatprep.subr.mxu0 0.0
  %273 = vmatpush1.msra.mxu0 0.0
  %274 = vmatprep.subr.mxu0 0.0
  %275 = vmatpush1.msra.mxu0 0.0
  %276 = vmatprep.subr.mxu0 0.0
  %277 = vmatpush1.msra.mxu0 0.0
  %278 = vmatprep.mubr.f32.mxu0 0.0
  %279 = vmatmul.mubr.f32.gmra.mrb[0].mxu0 %v212
  %v280 = vpop.f32.mrb[0].mxu0
  %v281 = vadd.f32 %v208, %v280
  %v282 = vpop.f32.mrb[0].mxu0
  %283 = vdwg.mxu0
  %v284 = vld [vmem:[%s4] sm:$0x1]
  %v286 = vlaneseq
  %v287 = vshrl.u32 %v286, 7
  %v288 = vsub.s32 0, %v287
  %v289 = vrot.slane %v284, %v288
  %v291 = vadd.f32 %v281, %v289
  %v292 = vxor.u32 %v291, 2147483648
  %v293 = vmul.f32 %v292, 1.442695
  %v294 = vpow.pop %v293
  %v295 = vadd.f32 %v294, 1.0
  %v296 = vrcp.pop %v295
  %v297 = vmul.f32 1.0, %v296
  %v298 = vld [vmem:[%s5] sm:$0xff]
  %v299 = vld [vmem:[%s5 + $0x8] sm:$0xff]
  %v300 = vld [vmem:[%s5 + $0x10] sm:$0xff]
  %v301 = vld [vmem:[%s5 + $0x18] sm:$0xff]
  %v302 = vld [vmem:[%s6] sm:$0x1]
  %v304 = vlaneseq
  %v305 = vshrl.u32 %v304, 7
  %v306 = vsub.s32 0, %v305
  %v307 = vrot.slane %v302, %v306
  %309 = vmatprep.subr.mxu0 0.0
  %310 = vmatpush1.msra.mxu0 %v298
  %311 = vmatprep.subr.mxu0 0.0
  %312 = vmatpush1.msra.mxu0 %v299
  %313 = vmatprep.subr.mxu0 0.0
  %314 = vmatpush1.msra.mxu0 %v300
  %315 = vmatprep.subr.mxu0 0.0
  %316 = vmatpush1.msra.mxu0 %v301
  %317 = vmatprep.subr.mxu0 0.0
  %318 = vmatpush1.msra.mxu0 0.0
  %319 = vmatprep.subr.mxu0 0.0
  %320 = vmatpush1.msra.mxu0 0.0
  %321 = vmatprep.subr.mxu0 0.0
  %322 = vmatpush1.msra.mxu0 0.0
  %323 = vmatprep.subr.mxu0 0.0
  %324 = vmatpush1.msra.mxu0 0.0
  %325 = vmatprep.subr.mxu0 0.0
  %326 = vmatpush1.msra.mxu0 0.0
  %327 = vmatprep.subr.mxu0 0.0
  %328 = vmatpush1.msra.mxu0 0.0
  %329 = vmatprep.subr.mxu0 0.0
  %330 = vmatpush1.msra.mxu0 0.0
  %331 = vmatprep.subr.mxu0 0.0
  %332 = vmatpush1.msra.mxu0 0.0
  %333 = vmatprep.subr.mxu0 0.0
  %334 = vmatpush1.msra.mxu0 0.0
  %335 = vmatprep.subr.mxu0 0.0
  %336 = vmatpush1.msra.mxu0 0.0
  %337 = vmatprep.subr.mxu0 0.0
  %338 = vmatpush1.msra.mxu0 0.0
  %339 = vmatprep.subr.mxu0 0.0
  %340 = vmatpush1.msra.mxu0 0.0
  %341 = vmatprep.subr.mxu0 0.0
  %342 = vmatpush1.msra.mxu0 0.0
  %343 = vmatprep.subr.mxu0 0.0
  %344 = vmatpush1.msra.mxu0 0.0
  %345 = vmatprep.subr.mxu0 0.0
  %346 = vmatpush1.msra.mxu0 0.0
  %347 = vmatprep.subr.mxu0 0.0
  %348 = vmatpush1.msra.mxu0 0.0
  %349 = vmatprep.subr.mxu0 0.0
  %350 = vmatpush1.msra.mxu0 0.0
  %351 = vmatprep.subr.mxu0 0.0
  %352 = vmatpush1.msra.mxu0 0.0
  %353 = vmatprep.subr.mxu0 0.0
  %354 = vmatpush1.msra.mxu0 0.0
  %355 = vmatprep.subr.mxu0 0.0
  %356 = vmatpush1.msra.mxu0 0.0
  %357 = vmatprep.subr.mxu0 0.0
  %358 = vmatpush1.msra.mxu0 0.0
  %359 = vmatprep.subr.mxu0 0.0
  %360 = vmatpush1.msra.mxu0 0.0
  %361 = vmatprep.subr.mxu0 0.0
  %362 = vmatpush1.msra.mxu0 0.0
  %363 = vmatprep.subr.mxu0 0.0
  %364 = vmatpush1.msra.mxu0 0.0
  %365 = vmatprep.subr.mxu0 0.0
  %366 = vmatpush1.msra.mxu0 0.0
  %367 = vmatprep.subr.mxu0 0.0
  %368 = vmatpush1.msra.mxu0 0.0
  %369 = vmatprep.subr.mxu0 0.0
  %370 = vmatpush1.msra.mxu0 0.0
  %371 = vmatprep.subr.mxu0 0.0
  %372 = vmatpush1.msra.mxu0 0.0
  %373 = vmatprep.mubr.f32.mxu0 0.0
  %374 = vmatmul.mubr.f32.gmra.mrb[0].mxu0 %v212
  %v375 = vpop.f32.mrb[0].mxu0
  %v376 = vadd.f32 %v307, %v375
  %v377 = vpop.f32.mrb[0].mxu0
  %378 = vdwg.mxu0
  %v379 = vld [vmem:[%s7] sm:$0xff]
  %v380 = vld [vmem:[%s7 + $0x8] sm:$0xff]
  %v381 = vld [vmem:[%s7 + $0x10] sm:$0xff]
  %v382 = vld [vmem:[%s7 + $0x18] sm:$0xff]
  %v383 = vld [vmem:[%s7 + $0x20] sm:$0xff]
  %v384 = vld [vmem:[%s7 + $0x28] sm:$0xff]
  %v385 = vld [vmem:[%s7 + $0x30] sm:$0xff]
  %v386 = vld [vmem:[%s7 + $0x38] sm:$0xff]
  %v387 = vld [vmem:[%s7 + $0x40] sm:$0xff]
  %v388 = vld [vmem:[%s7 + $0x48] sm:$0xff]
  %v389 = vld [vmem:[%s7 + $0x50] sm:$0xff]
  %v390 = vld [vmem:[%s7 + $0x58] sm:$0xff]
  %v391 = vld [vmem:[%s7 + $0x60] sm:$0xff]
  %v392 = vld [vmem:[%s7 + $0x68] sm:$0xff]
  %v393 = vld [vmem:[%s7 + $0x70] sm:$0xff]
  %v394 = vld [vmem:[%s7 + $0x78] sm:$0xff]
  %395 = vmatprep.subr.mxu0 0.0
  %396 = vmatpush1.msra.mxu0 %v379
  %397 = vmatprep.subr.mxu0 0.0
  %398 = vmatpush1.msra.mxu0 %v380
  %399 = vmatprep.subr.mxu0 0.0
  %400 = vmatpush1.msra.mxu0 %v381
  %401 = vmatprep.subr.mxu0 0.0
  %402 = vmatpush1.msra.mxu0 %v382
  %403 = vmatprep.subr.mxu0 0.0
  %404 = vmatpush1.msra.mxu0 %v383
  %405 = vmatprep.subr.mxu0 0.0
  %406 = vmatpush1.msra.mxu0 %v384
  %407 = vmatprep.subr.mxu0 0.0
  %408 = vmatpush1.msra.mxu0 %v385
  %409 = vmatprep.subr.mxu0 0.0
  %410 = vmatpush1.msra.mxu0 %v386
  %411 = vmatprep.subr.mxu0 0.0
  %412 = vmatpush1.msra.mxu0 %v387
  %413 = vmatprep.subr.mxu0 0.0
  %414 = vmatpush1.msra.mxu0 %v388
  %415 = vmatprep.subr.mxu0 0.0
  %416 = vmatpush1.msra.mxu0 %v389
  %417 = vmatprep.subr.mxu0 0.0
  %418 = vmatpush1.msra.mxu0 %v390
  %419 = vmatprep.subr.mxu0 0.0
  %420 = vmatpush1.msra.mxu0 %v391
  %421 = vmatprep.subr.mxu0 0.0
  %422 = vmatpush1.msra.mxu0 %v392
  %423 = vmatprep.subr.mxu0 0.0
  %424 = vmatpush1.msra.mxu0 %v393
  %425 = vmatprep.subr.mxu0 0.0
  %426 = vmatpush1.msra.mxu0 %v394
  %427 = vmatprep.subr.mxu0 0.0
  %428 = vmatpush1.msra.mxu0 0.0
  %429 = vmatprep.subr.mxu0 0.0
  %430 = vmatpush1.msra.mxu0 0.0
  %431 = vmatprep.subr.mxu0 0.0
  %432 = vmatpush1.msra.mxu0 0.0
  %433 = vmatprep.subr.mxu0 0.0
  %434 = vmatpush1.msra.mxu0 0.0
  %435 = vmatprep.subr.mxu0 0.0
  %436 = vmatpush1.msra.mxu0 0.0
  %437 = vmatprep.subr.mxu0 0.0
  %438 = vmatpush1.msra.mxu0 0.0
  %439 = vmatprep.subr.mxu0 0.0
  %440 = vmatpush1.msra.mxu0 0.0
  %441 = vmatprep.subr.mxu0 0.0
  %442 = vmatpush1.msra.mxu0 0.0
  %443 = vmatprep.subr.mxu0 0.0
  %444 = vmatpush1.msra.mxu0 0.0
  %445 = vmatprep.subr.mxu0 0.0
  %446 = vmatpush1.msra.mxu0 0.0
  %447 = vmatprep.subr.mxu0 0.0
  %448 = vmatpush1.msra.mxu0 0.0
  %449 = vmatprep.subr.mxu0 0.0
  %450 = vmatpush1.msra.mxu0 0.0
  %451 = vmatprep.subr.mxu0 0.0
  %452 = vmatpush1.msra.mxu0 0.0
  %453 = vmatprep.subr.mxu0 0.0
  %454 = vmatpush1.msra.mxu0 0.0
  %455 = vmatprep.subr.mxu0 0.0
  %456 = vmatpush1.msra.mxu0 0.0
  %457 = vmatprep.subr.mxu0 0.0
  %458 = vmatpush1.msra.mxu0 0.0
  %459 = vmatprep.mubr.f32.mxu0 0.0
  %460 = vmatmul.mubr.f32.gmra.mrb[0].mxu0 %v42
  %v461 = vpop.f32.mrb[0].mxu0
  %v462 = vadd.f32 0.0, %v461
  %v463 = vpop.f32.mrb[0].mxu0
  %464 = vdwg.mxu0
  %v465 = vadd.f32 %v376, %v462
  %v466 = vxor.u32 %v465, 2147483648
  %v467 = vmul.f32 %v466, 1.442695
  %v468 = vpow.pop %v467
  %v469 = vadd.f32 %v468, 1.0
  %v470 = vrcp.pop %v469
  %v471 = vmul.f32 1.0, %v470
  %v472 = vmul.f32 %v471, %v42
  %v473 = vadd.f32 %v472, 0.0
  %474 = vmatprep.subr.mxu0 0.0
  %475 = vmatpush1.msra.mxu0 %v43
  %476 = vmatprep.subr.mxu0 0.0
  %477 = vmatpush1.msra.mxu0 %v44
  %478 = vmatprep.subr.mxu0 0.0
  %479 = vmatpush1.msra.mxu0 %v45
  %480 = vmatprep.subr.mxu0 0.0
  %481 = vmatpush1.msra.mxu0 %v46
  %482 = vmatprep.subr.mxu0 0.0
  %483 = vmatpush1.msra.mxu0 %v47
  %484 = vmatprep.subr.mxu0 0.0
  %485 = vmatpush1.msra.mxu0 %v48
  %486 = vmatprep.subr.mxu0 0.0
  %487 = vmatpush1.msra.mxu0 %v49
  %488 = vmatprep.subr.mxu0 0.0
  %489 = vmatpush1.msra.mxu0 %v50
  %490 = vmatprep.subr.mxu0 0.0
  %491 = vmatpush1.msra.mxu0 %v51
  %492 = vmatprep.subr.mxu0 0.0
  %493 = vmatpush1.msra.mxu0 %v52
  %494 = vmatprep.subr.mxu0 0.0
  %495 = vmatpush1.msra.mxu0 %v53
  %496 = vmatprep.subr.mxu0 0.0
  %497 = vmatpush1.msra.mxu0 %v54
  %498 = vmatprep.subr.mxu0 0.0
  %499 = vmatpush1.msra.mxu0 %v55
  %500 = vmatprep.subr.mxu0 0.0
  %501 = vmatpush1.msra.mxu0 %v56
  %502 = vmatprep.subr.mxu0 0.0
  %503 = vmatpush1.msra.mxu0 %v57
  %504 = vmatprep.subr.mxu0 0.0
  %505 = vmatpush1.msra.mxu0 %v58
  %506 = vmatprep.subr.mxu0 0.0
  %507 = vmatpush1.msra.mxu0 0.0
  %508 = vmatprep.subr.mxu0 0.0
  %509 = vmatpush1.msra.mxu0 0.0
  %510 = vmatprep.subr.mxu0 0.0
  %511 = vmatpush1.msra.mxu0 0.0
  %512 = vmatprep.subr.mxu0 0.0
  %513 = vmatpush1.msra.mxu0 0.0
  %514 = vmatprep.subr.mxu0 0.0
  %515 = vmatpush1.msra.mxu0 0.0
  %516 = vmatprep.subr.mxu0 0.0
  %517 = vmatpush1.msra.mxu0 0.0
  %518 = vmatprep.subr.mxu0 0.0
  %519 = vmatpush1.msra.mxu0 0.0
  %520 = vmatprep.subr.mxu0 0.0
  %521 = vmatpush1.msra.mxu0 0.0
  %522 = vmatprep.subr.mxu0 0.0
  %523 = vmatpush1.msra.mxu0 0.0
  %524 = vmatprep.subr.mxu0 0.0
  %525 = vmatpush1.msra.mxu0 0.0
  %526 = vmatprep.subr.mxu0 0.0
  %527 = vmatpush1.msra.mxu0 0.0
  %528 = vmatprep.subr.mxu0 0.0
  %529 = vmatpush1.msra.mxu0 0.0
  %530 = vmatprep.subr.mxu0 0.0
  %531 = vmatpush1.msra.mxu0 0.0
  %532 = vmatprep.subr.mxu0 0.0
  %533 = vmatpush1.msra.mxu0 0.0
  %534 = vmatprep.subr.mxu0 0.0
  %535 = vmatpush1.msra.mxu0 0.0
  %536 = vmatprep.subr.mxu0 0.0
  %537 = vmatpush1.msra.mxu0 0.0
  %538 = vmatprep.mubr.f32.mxu0 0.0
  %539 = vmatmul.mubr.f32.gmra.mrb[0].mxu0 %v473
  %v540 = vpop.f32.mrb[0].mxu0
  %v541 = vadd.f32 0.0, %v540
  %v542 = vpop.f32.mrb[0].mxu0
  %543 = vdwg.mxu0
  %v544 = vld [vmem:[%s8] sm:$0xff]
  %v545 = vld [vmem:[%s8 + $0x8] sm:$0xff]
  %v546 = vld [vmem:[%s8 + $0x10] sm:$0xff]
  %v547 = vld [vmem:[%s8 + $0x18] sm:$0xff]
  %v548 = vld [vmem:[%s9] sm:$0x1]
  %v550 = vlaneseq
  %v551 = vshrl.u32 %v550, 7
  %v552 = vsub.s32 0, %v551
  %v553 = vrot.slane %v548, %v552
  %555 = vmatprep.subr.mxu0 0.0
  %556 = vmatpush1.msra.mxu0 %v544
  %557 = vmatprep.subr.mxu0 0.0
  %558 = vmatpush1.msra.mxu0 %v545
  %559 = vmatprep.subr.mxu0 0.0
  %560 = vmatpush1.msra.mxu0 %v546
  %561 = vmatprep.subr.mxu0 0.0
  %562 = vmatpush1.msra.mxu0 %v547
  %563 = vmatprep.subr.mxu0 0.0
  %564 = vmatpush1.msra.mxu0 0.0
  %565 = vmatprep.subr.mxu0 0.0
  %566 = vmatpush1.msra.mxu0 0.0
  %567 = vmatprep.subr.mxu0 0.0
  %568 = vmatpush1.msra.mxu0 0.0
  %569 = vmatprep.subr.mxu0 0.0
  %570 = vmatpush1.msra.mxu0 0.0
  %571 = vmatprep.subr.mxu0 0.0
  %572 = vmatpush1.msra.mxu0 0.0
  %573 = vmatprep.subr.mxu0 0.0
  %574 = vmatpush1.msra.mxu0 0.0
  %575 = vmatprep.subr.mxu0 0.0
  %576 = vmatpush1.msra.mxu0 0.0
  %577 = vmatprep.subr.mxu0 0.0
  %578 = vmatpush1.msra.mxu0 0.0
  %579 = vmatprep.subr.mxu0 0.0
  %580 = vmatpush1.msra.mxu0 0.0
  %581 = vmatprep.subr.mxu0 0.0
  %582 = vmatpush1.msra.mxu0 0.0
  %583 = vmatprep.subr.mxu0 0.0
  %584 = vmatpush1.msra.mxu0 0.0
  %585 = vmatprep.subr.mxu0 0.0
  %586 = vmatpush1.msra.mxu0 0.0
  %587 = vmatprep.subr.mxu0 0.0
  %588 = vmatpush1.msra.mxu0 0.0
  %589 = vmatprep.subr.mxu0 0.0
  %590 = vmatpush1.msra.mxu0 0.0
  %591 = vmatprep.subr.mxu0 0.0
  %592 = vmatpush1.msra.mxu0 0.0
  %593 = vmatprep.subr.mxu0 0.0
  %594 = vmatpush1.msra.mxu0 0.0
  %595 = vmatprep.subr.mxu0 0.0
  %596 = vmatpush1.msra.mxu0 0.0
  %597 = vmatprep.subr.mxu0 0.0
  %598 = vmatpush1.msra.mxu0 0.0
  %599 = vmatprep.subr.mxu0 0.0
  %600 = vmatpush1.msra.mxu0 0.0
  %601 = vmatprep.subr.mxu0 0.0
  %602 = vmatpush1.msra.mxu0 0.0
  %603 = vmatprep.subr.mxu0 0.0
  %604 = vmatpush1.msra.mxu0 0.0
  %605 = vmatprep.subr.mxu0 0.0
  %606 = vmatpush1.msra.mxu0 0.0
  %607 = vmatprep.subr.mxu0 0.0
  %608 = vmatpush1.msra.mxu0 0.0
  %609 = vmatprep.subr.mxu0 0.0
  %610 = vmatpush1.msra.mxu0 0.0
  %611 = vmatprep.subr.mxu0 0.0
  %612 = vmatpush1.msra.mxu0 0.0
  %613 = vmatprep.subr.mxu0 0.0
  %614 = vmatpush1.msra.mxu0 0.0
  %615 = vmatprep.subr.mxu0 0.0
  %616 = vmatpush1.msra.mxu0 0.0
  %617 = vmatprep.subr.mxu0 0.0
  %618 = vmatpush1.msra.mxu0 0.0
  %619 = vmatprep.mubr.f32.mxu0 0.0
  %620 = vmatmul.mubr.f32.gmra.mrb[0].mxu0 %v212
  %v621 = vpop.f32.mrb[0].mxu0
  %v622 = vadd.f32 %v553, %v621
  %v623 = vpop.f32.mrb[0].mxu0
  %624 = vdwg.mxu0
  %v625 = vld [vmem:[%s10] sm:$0xff]
  %v626 = vld [vmem:[%s10 + $0x8] sm:$0xff]
  %v627 = vld [vmem:[%s10 + $0x10] sm:$0xff]
  %v628 = vld [vmem:[%s10 + $0x18] sm:$0xff]
  %v630 = vsel %vm137, %v541, 0
  %632 = vmatprep.subr.mxu0 0.0
  %633 = vmatpush1.msra.mxu0 %v625
  %634 = vmatprep.subr.mxu0 0.0
  %635 = vmatpush1.msra.mxu0 %v626
  %636 = vmatprep.subr.mxu0 0.0
  %637 = vmatpush1.msra.mxu0 %v627
  %638 = vmatprep.subr.mxu0 0.0
  %639 = vmatpush1.msra.mxu0 %v628
  %640 = vmatprep.subr.mxu0 0.0
  %641 = vmatpush1.msra.mxu0 0.0
  %642 = vmatprep.subr.mxu0 0.0
  %643 = vmatpush1.msra.mxu0 0.0
  %644 = vmatprep.subr.mxu0 0.0
  %645 = vmatpush1.msra.mxu0 0.0
  %646 = vmatprep.subr.mxu0 0.0
  %647 = vmatpush1.msra.mxu0 0.0
  %648 = vmatprep.subr.mxu0 0.0
  %649 = vmatpush1.msra.mxu0 0.0
  %650 = vmatprep.subr.mxu0 0.0
  %651 = vmatpush1.msra.mxu0 0.0
  %652 = vmatprep.subr.mxu0 0.0
  %653 = vmatpush1.msra.mxu0 0.0
  %654 = vmatprep.subr.mxu0 0.0
  %655 = vmatpush1.msra.mxu0 0.0
  %656 = vmatprep.subr.mxu0 0.0
  %657 = vmatpush1.msra.mxu0 0.0
  %658 = vmatprep.subr.mxu0 0.0
  %659 = vmatpush1.msra.mxu0 0.0
  %660 = vmatprep.subr.mxu0 0.0
  %661 = vmatpush1.msra.mxu0 0.0
  %662 = vmatprep.subr.mxu0 0.0
  %663 = vmatpush1.msra.mxu0 0.0
  %664 = vmatprep.subr.mxu0 0.0
  %665 = vmatpush1.msra.mxu0 0.0
  %666 = vmatprep.subr.mxu0 0.0
  %667 = vmatpush1.msra.mxu0 0.0
  %668 = vmatprep.subr.mxu0 0.0
  %669 = vmatpush1.msra.mxu0 0.0
  %670 = vmatprep.subr.mxu0 0.0
  %671 = vmatpush1.msra.mxu0 0.0
  %672 = vmatprep.subr.mxu0 0.0
  %673 = vmatpush1.msra.mxu0 0.0
  %674 = vmatprep.subr.mxu0 0.0
  %675 = vmatpush1.msra.mxu0 0.0
  %676 = vmatprep.subr.mxu0 0.0
  %677 = vmatpush1.msra.mxu0 0.0
  %678 = vmatprep.subr.mxu0 0.0
  %679 = vmatpush1.msra.mxu0 0.0
  %680 = vmatprep.subr.mxu0 0.0
  %681 = vmatpush1.msra.mxu0 0.0
  %682 = vmatprep.subr.mxu0 0.0
  %683 = vmatpush1.msra.mxu0 0.0
  %684 = vmatprep.subr.mxu0 0.0
  %685 = vmatpush1.msra.mxu0 0.0
  %686 = vmatprep.subr.mxu0 0.0
  %687 = vmatpush1.msra.mxu0 0.0
  %688 = vmatprep.subr.mxu0 0.0
  %689 = vmatpush1.msra.mxu0 0.0
  %690 = vmatprep.subr.mxu0 0.0
  %691 = vmatpush1.msra.mxu0 0.0
  %692 = vmatprep.subr.mxu0 0.0
  %693 = vmatpush1.msra.mxu0 0.0
  %694 = vmatprep.subr.mxu0 0.0
  %695 = vmatpush1.msra.mxu0 0.0
  %696 = vmatprep.mubr.f32.mxu0 0.0
  %697 = vmatmul.mubr.f32.gmra.mrb[0].mxu0 %v630
  %v698 = vpop.f32.mrb[0].mxu0
  %v699 = vadd.f32 0.0, %v698
  %v700 = vpop.f32.mrb[0].mxu0
  %701 = vdwg.mxu0
  %v702 = vadd.f32 %v622, %v699
  %v703 = vtanh.pop %v702
  %v704 = vsub.f32 1.0, %v297
  %v705 = vmul.f32 %v704, %v126
  %v706 = vmul.f32 %v297, %v703
  %v707 = vadd.f32 %v705, %v706
  %708 = vst.msk [vmem:[%s12] sm:$0xff] %vm137, %v707
  // Predicated region
  $region50: #{closed_call.4} parent=0 // pred_check
    _
  $region51: #{closed_call.4} parent=0 // pred_check_branch
    %710 = sbr.rel (0) target = $region53
  $region52: #{closed_call.4} parent=0 // pred_region
    _
  $region53: #{closed_call.4} parent=0 // pred_fallthru
    _
  // Predicated region
  $region54: #{closed_call.4} parent=0 // pred_check
    _
  $region55: #{closed_call.4} parent=0 // pred_check_branch
    %712 = sbr.rel (0) target = $region57
  $region56: #{closed_call.4} parent=0 // pred_region
    _
  $region57: #{closed_call.4} parent=0 // pred_fallthru
    _

// kernel: _decoder_device.3
$region0: #{_decoder_device.3}
  #allocation0 [shape = 'u32[]', space=smem, size = 0x4, offset = 0x4, fixed_abs, tag = 'smem constant byte address 0x4 - core index']
  #allocation1 [shape = 'u32[144,128]{1,0:T(1,128)}', space=vmem, size = 0x12000, scoped, tag = 'internal scratch']
  %s0 = inlined_call_operand.vmem [shape: f32[16,32], index: 0, kind: input, shape index: {}]
  %s1 = inlined_call_operand.vmem [shape: f32[1,16,128], index: 1, kind: input, shape index: {}]
  %s2 = inlined_call_operand.vmem [shape: f32[16,32], index: 2, kind: input, shape index: {}]
  %s3 = inlined_call_operand.vmem [shape: f32[32,32], index: 3, kind: input, shape index: {}]
  %s4 = inlined_call_operand.vmem [shape: f32[32,32], index: 4, kind: input, shape index: {}]
  %s5 = inlined_call_operand.vmem [shape: f32[1,32], index: 5, kind: input, shape index: {}]
  %s6 = inlined_call_operand.vmem [shape: f32[32,32], index: 6, kind: input, shape index: {}]
  %s7 = inlined_call_operand.vmem [shape: f32[32,32], index: 7, kind: input, shape index: {}]
  %s8 = inlined_call_operand.vmem [shape: f32[1,32], index: 8, kind: input, shape index: {}]
  %s9 = inlined_call_operand.vmem [shape: f32[32,128], index: 9, kind: input, shape index: {}]
  %s10 = inlined_call_operand.vmem [shape: f32[1,128], index: 10, kind: input, shape index: {}]
  %s11 = inlined_call_operand.vmem [shape: f32[128,32], index: 11, kind: input, shape index: {}]
  %s12 = inlined_call_operand.vmem [shape: f32[16,128], index: 12, kind: output, shape index: {}]
  %s13 = sld [smem:[#allocation0]]
  $region81: #{_decoder_device.3} parent=0
    _
  %s15 = ssub.s32 1, %s13
  %s16 = scalar_select 0, %s15, %s13
  loop: start=0, step=1, limit=4
  $region2: #{_decoder_device.3} parent=0 // loop_pre_header
    _
  $region3: #{_decoder_device.3} parent=0 // loop_header
    %s18 = sphi 0, %s22
    %p19 = scmp.ge.s32.totalorder %s18, 4
    %s28 = sphi 0, %s30
    %s31 = sphi 0, %s28
    %s32 = sphi 0, %s31
    %s48 = sphi 0, %s32
    %s54 = sphi 0, %s56
    %s57 = sphi 0, %s54
    %s58 = sphi 0, %s57
    %s74 = sphi 0, %s58
    %s80 = sphi 0, %s82
    %s83 = sphi 0, %s80
    %s84 = sphi 0, %s83
    %s100 = sphi 0, %s84
    %s104 = sphi 0, %s104
    %s106 = sphi 0, %s104
    %s107 = sphi 0, %s106
    %s121 = sphi 0, %s107
    %s125 = sphi 0, %s125
    %s127 = sphi 0, %s125
    %s128 = sphi 0, %s127
    %s142 = sphi 0, %s128
    %s146 = sphi 0, %s146
    %s148 = sphi 0, %s146
    %s149 = sphi 0, %s148
    %s163 = sphi 0, %s149
    %s167 = sphi 0, %s167
    %s169 = sphi 0, %s167
    %s170 = sphi 0, %s169
    %s184 = sphi 0, %s170
    %s188 = sphi 0, %s188
    %s190 = sphi 0, %s188
    %s191 = sphi 0, %s190
    %s205 = sphi 0, %s191
    %s209 = sphi 0, %s209
    %s211 = sphi 0, %s209
    %s212 = sphi 0, %s211
    %s226 = sphi 0, %s212
    %s230 = sphi 0, %s230
    %s232 = sphi 0, %s230
    %s233 = sphi 0, %s232
    %s247 = sphi 0, %s233
    %s251 = sphi 0, %s251
    %s253 = sphi 0, %s251
    %s254 = sphi 0, %s253
    %s268 = sphi 0, %s254
    %s272 = sphi 0, %s272
    %s274 = sphi 0, %s272
    %s275 = sphi 0, %s274
    %s289 = sphi 0, %s275
    %s295 = sphi 0, %s297
    %s298 = sphi 0, %s295
    %s299 = sphi 0, %s298
    %s315 = sphi 0, %s299
  $region4: #{_decoder_device.3} parent=0 // loop_header_branch
    %21 = sbr.rel (%p19) target = $region8
  $region5: #{_decoder_device.3} parent=0 // loop_body
    %s23 = ssub.s32 %s18, 1
    %s24 = ssub.s32 %s18, 2
    %s25 = sadd.s32 %s18, 1
    %s26 = ssub.s32 %s18, %s25
    %p27 = scmp.eq.s32.totalorder %s26, 0
    %s29 = sadd.s32 %s28, 1
    %s30 = scalar_select %p27, %s28, %s29
    %p33 = pneg %p27
    %p34 = scmp.eq.s32.totalorder %s18, 1
    %p35 = por %p33, %p34
    %p36 = scmp.ne.s32.totalorder %s28, %s31
    %p37 = scmp.eq.s32.totalorder %s18, 0
    %p38 = por %p36, %p37
    %p39 = scmp.ne.s32.totalorder %s28, %s31
    %p40 = scmp.eq.s32.totalorder %s23, 1
    %p41 = por %p39, %p40
    %p42 = scmp.ne.s32.totalorder %s31, %s32
    %p43 = scmp.eq.s32.totalorder %s23, 0
    %p44 = por %p42, %p43
    %p45 = scmp.ne.s32.totalorder %s31, %s32
    %p46 = scmp.eq.s32.totalorder %s24, 1
    %p47 = por %p45, %p46
    %p49 = scmp.ne.s32.totalorder %s32, %s48
    %p50 = scmp.eq.s32.totalorder %s24, 0
    %p51 = por %p49, %p50
    %s52 = ssub.s32 %s18, %s25
    %p53 = scmp.eq.s32.totalorder %s52, 0
    %s55 = sadd.s32 %s54, 1
    %s56 = scalar_select %p53, %s54, %s55
    %p59 = pneg %p53
    %p60 = scmp.eq.s32.totalorder %s18, 1
    %p61 = por %p59, %p60
    %p62 = scmp.ne.s32.totalorder %s54, %s57
    %p63 = scmp.eq.s32.totalorder %s18, 0
    %p64 = por %p62, %p63
    %p65 = scmp.ne.s32.totalorder %s54, %s57
    %p66 = scmp.eq.s32.totalorder %s23, 1
    %p67 = por %p65, %p66
    %p68 = scmp.ne.s32.totalorder %s57, %s58
    %p69 = scmp.eq.s32.totalorder %s23, 0
    %p70 = por %p68, %p69
    %p71 = scmp.ne.s32.totalorder %s57, %s58
    %p72 = scmp.eq.s32.totalorder %s24, 1
    %p73 = por %p71, %p72
    %p75 = scmp.ne.s32.totalorder %s58, %s74
    %p76 = scmp.eq.s32.totalorder %s24, 0
    %p77 = por %p75, %p76
    %s78 = ssub.s32 %s18, %s25
    %p79 = scmp.eq.s32.totalorder %s78, 0
    %s81 = sadd.s32 %s80, 1
    %s82 = scalar_select %p79, %s80, %s81
    %p85 = pneg %p79
    %p86 = scmp.eq.s32.totalorder %s18, 1
    %p87 = por %p85, %p86
    %p88 = scmp.ne.s32.totalorder %s80, %s83
    %p89 = scmp.eq.s32.totalorder %s18, 0
    %p90 = por %p88, %p89
    %p91 = scmp.ne.s32.totalorder %s80, %s83
    %p92 = scmp.eq.s32.totalorder %s23, 1
    %p93 = por %p91, %p92
    %p94 = scmp.ne.s32.totalorder %s83, %s84
    %p95 = scmp.eq.s32.totalorder %s23, 0
    %p96 = por %p94, %p95
    %p97 = scmp.ne.s32.totalorder %s83, %s84
    %p98 = scmp.eq.s32.totalorder %s24, 1
    %p99 = por %p97, %p98
    %p101 = scmp.ne.s32.totalorder %s84, %s100
    %p102 = scmp.eq.s32.totalorder %s24, 0
    %p103 = por %p101, %p102
    %s105 = sadd.s32 %s104, 1
    %p108 = scmp.eq.s32.totalorder %s18, 1
    %p109 = scmp.ne.s32.totalorder %s104, %s106
    %p110 = scmp.eq.s32.totalorder %s18, 0
    %p111 = por %p109, %p110
    %p112 = scmp.ne.s32.totalorder %s104, %s106
    %p113 = scmp.eq.s32.totalorder %s23, 1
    %p114 = por %p112, %p113
    %p115 = scmp.ne.s32.totalorder %s106, %s107
    %p116 = scmp.eq.s32.totalorder %s23, 0
    %p117 = por %p115, %p116
    %p118 = scmp.ne.s32.totalorder %s106, %s107
    %p119 = scmp.eq.s32.totalorder %s24, 1
    %p120 = por %p118, %p119
    %p122 = scmp.ne.s32.totalorder %s107, %s121
    %p123 = scmp.eq.s32.totalorder %s24, 0
    %p124 = por %p122, %p123
    %s126 = sadd.s32 %s125, 1
    %p129 = scmp.eq.s32.totalorder %s18, 1
    %p130 = scmp.ne.s32.totalorder %s125, %s127
    %p131 = scmp.eq.s32.totalorder %s18, 0
    %p132 = por %p130, %p131
    %p133 = scmp.ne.s32.totalorder %s125, %s127
    %p134 = scmp.eq.s32.totalorder %s23, 1
    %p135 = por %p133, %p134
    %p136 = scmp.ne.s32.totalorder %s127, %s128
    %p137 = scmp.eq.s32.totalorder %s23, 0
    %p138 = por %p136, %p137
    %p139 = scmp.ne.s32.totalorder %s127, %s128
    %p140 = scmp.eq.s32.totalorder %s24, 1
    %p141 = por %p139, %p140
    %p143 = scmp.ne.s32.totalorder %s128, %s142
    %p144 = scmp.eq.s32.totalorder %s24, 0
    %p145 = por %p143, %p144
    %s147 = sadd.s32 %s146, 1
    %p150 = scmp.eq.s32.totalorder %s18, 1
    %p151 = scmp.ne.s32.totalorder %s146, %s148
    %p152 = scmp.eq.s32.totalorder %s18, 0
    %p153 = por %p151, %p152
    %p154 = scmp.ne.s32.totalorder %s146, %s148
    %p155 = scmp.eq.s32.totalorder %s23, 1
    %p156 = por %p154, %p155
    %p157 = scmp.ne.s32.totalorder %s148, %s149
    %p158 = scmp.eq.s32.totalorder %s23, 0
    %p159 = por %p157, %p158
    %p160 = scmp.ne.s32.totalorder %s148, %s149
    %p161 = scmp.eq.s32.totalorder %s24, 1
    %p162 = por %p160, %p161
    %p164 = scmp.ne.s32.totalorder %s149, %s163
    %p165 = scmp.eq.s32.totalorder %s24, 0
    %p166 = por %p164, %p165
    %s168 = sadd.s32 %s167, 1
    %p171 = scmp.eq.s32.totalorder %s18, 1
    %p172 = scmp.ne.s32.totalorder %s167, %s169
    %p173 = scmp.eq.s32.totalorder %s18, 0
    %p174 = por %p172, %p173
    %p175 = scmp.ne.s32.totalorder %s167, %s169
    %p176 = scmp.eq.s32.totalorder %s23, 1
    %p177 = por %p175, %p176
    %p178 = scmp.ne.s32.totalorder %s169, %s170
    %p179 = scmp.eq.s32.totalorder %s23, 0
    %p180 = por %p178, %p179
    %p181 = scmp.ne.s32.totalorder %s169, %s170
    %p182 = scmp.eq.s32.totalorder %s24, 1
    %p183 = por %p181, %p182
    %p185 = scmp.ne.s32.totalorder %s170, %s184
    %p186 = scmp.eq.s32.totalorder %s24, 0
    %p187 = por %p185, %p186
    %s189 = sadd.s32 %s188, 1
    %p192 = scmp.eq.s32.totalorder %s18, 1
    %p193 = scmp.ne.s32.totalorder %s188, %s190
    %p194 = scmp.eq.s32.totalorder %s18, 0
    %p195 = por %p193, %p194
    %p196 = scmp.ne.s32.totalorder %s188, %s190
    %p197 = scmp.eq.s32.totalorder %s23, 1
    %p198 = por %p196, %p197
    %p199 = scmp.ne.s32.totalorder %s190, %s191
    %p200 = scmp.eq.s32.totalorder %s23, 0
    %p201 = por %p199, %p200
    %p202 = scmp.ne.s32.totalorder %s190, %s191
    %p203 = scmp.eq.s32.totalorder %s24, 1
    %p204 = por %p202, %p203
    %p206 = scmp.ne.s32.totalorder %s191, %s205
    %p207 = scmp.eq.s32.totalorder %s24, 0
    %p208 = por %p206, %p207
    %s210 = sadd.s32 %s209, 1
    %p213 = scmp.eq.s32.totalorder %s18, 1
    %p214 = scmp.ne.s32.totalorder %s209, %s211
    %p215 = scmp.eq.s32.totalorder %s18, 0
    %p216 = por %p214, %p215
    %p217 = scmp.ne.s32.totalorder %s209, %s211
    %p218 = scmp.eq.s32.totalorder %s23, 1
    %p219 = por %p217, %p218
    %p220 = scmp.ne.s32.totalorder %s211, %s212
    %p221 = scmp.eq.s32.totalorder %s23, 0
    %p222 = por %p220, %p221
    %p223 = scmp.ne.s32.totalorder %s211, %s212
    %p224 = scmp.eq.s32.totalorder %s24, 1
    %p225 = por %p223, %p224
    %p227 = scmp.ne.s32.totalorder %s212, %s226
    %p228 = scmp.eq.s32.totalorder %s24, 0
    %p229 = por %p227, %p228
    %s231 = sadd.s32 %s230, 1
    %p234 = scmp.eq.s32.totalorder %s18, 1
    %p235 = scmp.ne.s32.totalorder %s230, %s232
    %p236 = scmp.eq.s32.totalorder %s18, 0
    %p237 = por %p235, %p236
    %p238 = scmp.ne.s32.totalorder %s230, %s232
    %p239 = scmp.eq.s32.totalorder %s23, 1
    %p240 = por %p238, %p239
    %p241 = scmp.ne.s32.totalorder %s232, %s233
    %p242 = scmp.eq.s32.totalorder %s23, 0
    %p243 = por %p241, %p242
    %p244 = scmp.ne.s32.totalorder %s232, %s233
    %p245 = scmp.eq.s32.totalorder %s24, 1
    %p246 = por %p244, %p245
    %p248 = scmp.ne.s32.totalorder %s233, %s247
    %p249 = scmp.eq.s32.totalorder %s24, 0
    %p250 = por %p248, %p249
    %s252 = sadd.s32 %s251, 1
    %p255 = scmp.eq.s32.totalorder %s18, 1
    %p256 = scmp.ne.s32.totalorder %s251, %s253
    %p257 = scmp.eq.s32.totalorder %s18, 0
    %p258 = por %p256, %p257
    %p259 = scmp.ne.s32.totalorder %s251, %s253
    %p260 = scmp.eq.s32.totalorder %s23, 1
    %p261 = por %p259, %p260
    %p262 = scmp.ne.s32.totalorder %s253, %s254
    %p263 = scmp.eq.s32.totalorder %s23, 0
    %p264 = por %p262, %p263
    %p265 = scmp.ne.s32.totalorder %s253, %s254
    %p266 = scmp.eq.s32.totalorder %s24, 1
    %p267 = por %p265, %p266
    %p269 = scmp.ne.s32.totalorder %s254, %s268
    %p270 = scmp.eq.s32.totalorder %s24, 0
    %p271 = por %p269, %p270
    %s273 = sadd.s32 %s272, 1
    %p276 = scmp.eq.s32.totalorder %s18, 1
    %p277 = scmp.ne.s32.totalorder %s272, %s274
    %p278 = scmp.eq.s32.totalorder %s18, 0
    %p279 = por %p277, %p278
    %p280 = scmp.ne.s32.totalorder %s272, %s274
    %p281 = scmp.eq.s32.totalorder %s23, 1
    %p282 = por %p280, %p281
    %p283 = scmp.ne.s32.totalorder %s274, %s275
    %p284 = scmp.eq.s32.totalorder %s23, 0
    %p285 = por %p283, %p284
    %p286 = scmp.ne.s32.totalorder %s274, %s275
    %p287 = scmp.eq.s32.totalorder %s24, 1
    %p288 = por %p286, %p287
    %p290 = scmp.ne.s32.totalorder %s275, %s289
    %p291 = scmp.eq.s32.totalorder %s24, 0
    %p292 = por %p290, %p291
    %s293 = ssub.s32 %s18, %s25
    %p294 = scmp.eq.s32.totalorder %s293, 0
    %s296 = sadd.s32 %s295, 1
    %s297 = scalar_select %p294, %s295, %s296
    %p300 = pneg %p294
    %p301 = scmp.eq.s32.totalorder %s18, 1
    %p302 = por %p300, %p301
    %p303 = scmp.ne.s32.totalorder %s295, %s298
    %p304 = scmp.eq.s32.totalorder %s18, 0
    %p305 = por %p303, %p304
    %p306 = scmp.ne.s32.totalorder %s295, %s298
    %p307 = scmp.eq.s32.totalorder %s23, 1
    %p308 = por %p306, %p307
    %p309 = scmp.ne.s32.totalorder %s298, %s299
    %p310 = scmp.eq.s32.totalorder %s23, 0
    %p311 = por %p309, %p310
    %p312 = scmp.ne.s32.totalorder %s298, %s299
    %p313 = scmp.eq.s32.totalorder %s24, 1
    %p314 = por %p312, %p313
    %p316 = scmp.ne.s32.totalorder %s299, %s315
    %p317 = scmp.eq.s32.totalorder %s24, 0
    %p318 = por %p316, %p317
    %p319 = scmp.le.s32.totalorder 1, %s18
    %p320 = scmp.lt.s32.totalorder %s18, 3
    %p321 = pnand %p319, %p320
    %p322 = pneg %p321
    // Predicated region
    $region9: #{_decoder_device.3} parent=5 // pred_check
      _
    $region10: #{_decoder_device.3} parent=5 // pred_check_branch
      %324 = sbr.rel (%p321) target = $region12
    $region11: #{_decoder_device.3} parent=5 // pred_region
      %s325 = ssub.s32 %s18, 1
      // Predicated region
      $region13: #{_decoder_device.3} parent=11 // pred_check
        %p326 = pneg %p117
      $region14: #{_decoder_device.3} parent=11 // pred_check_branch
        %328 = sbr.rel (%p326) target = $region16
      $region15: #{_decoder_device.3} parent=11 // pred_region
        _
      $region16: #{_decoder_device.3} parent=11 // pred_fallthru
        _
      // Predicated region
      $region17: #{_decoder_device.3} parent=11 // pred_check
        %p329 = pneg %p138
      $region18: #{_decoder_device.3} parent=11 // pred_check_branch
        %331 = sbr.rel (%p329) target = $region20
      $region19: #{_decoder_device.3} parent=11 // pred_region
        _
      $region20: #{_decoder_device.3} parent=11 // pred_fallthru
        _
      // Predicated region
      $region21: #{_decoder_device.3} parent=11 // pred_check
        %p332 = pneg %p159
      $region22: #{_decoder_device.3} parent=11 // pred_check_branch
        %334 = sbr.rel (%p332) target = $region24
      $region23: #{_decoder_device.3} parent=11 // pred_region
        _
      $region24: #{_decoder_device.3} parent=11 // pred_fallthru
        _
      // Predicated region
      $region25: #{_decoder_device.3} parent=11 // pred_check
        %p335 = pneg %p180
      $region26: #{_decoder_device.3} parent=11 // pred_check_branch
        %337 = sbr.rel (%p335) target = $region28
      $region27: #{_decoder_device.3} parent=11 // pred_region
        _
      $region28: #{_decoder_device.3} parent=11 // pred_fallthru
        _
      // Predicated region
      $region29: #{_decoder_device.3} parent=11 // pred_check
        %p338 = pneg %p201
      $region30: #{_decoder_device.3} parent=11 // pred_check_branch
        %340 = sbr.rel (%p338) target = $region32
      $region31: #{_decoder_device.3} parent=11 // pred_region
        _
      $region32: #{_decoder_device.3} parent=11 // pred_fallthru
        _
      // Predicated region
      $region33: #{_decoder_device.3} parent=11 // pred_check
        %p341 = pneg %p222
      $region34: #{_decoder_device.3} parent=11 // pred_check_branch
        %343 = sbr.rel (%p341) target = $region36
      $region35: #{_decoder_device.3} parent=11 // pred_region
        _
      $region36: #{_decoder_device.3} parent=11 // pred_fallthru
        _
      // Predicated region
      $region37: #{_decoder_device.3} parent=11 // pred_check
        %p344 = pneg %p243
      $region38: #{_decoder_device.3} parent=11 // pred_check_branch
        %346 = sbr.rel (%p344) target = $region40
      $region39: #{_decoder_device.3} parent=11 // pred_region
        _
      $region40: #{_decoder_device.3} parent=11 // pred_fallthru
        _
      // Predicated region
      $region41: #{_decoder_device.3} parent=11 // pred_check
        %p347 = pneg %p264
      $region42: #{_decoder_device.3} parent=11 // pred_check_branch
        %349 = sbr.rel (%p347) target = $region44
      $region43: #{_decoder_device.3} parent=11 // pred_region
        _
      $region44: #{_decoder_device.3} parent=11 // pred_fallthru
        _
      // Predicated region
      $region45: #{_decoder_device.3} parent=11 // pred_check
        %p350 = pneg %p285
      $region46: #{_decoder_device.3} parent=11 // pred_check_branch
        %352 = sbr.rel (%p350) target = $region48
      $region47: #{_decoder_device.3} parent=11 // pred_region
        _
      $region48: #{_decoder_device.3} parent=11 // pred_fallthru
        _
    $region12: #{_decoder_device.3} parent=5 // pred_fallthru
      _
    %p353 = scmp.lt.s32.totalorder %s18, 2
    // Predicated region
    $region49: #{_decoder_device.3} parent=5 // pred_check
      %p354 = pneg %p353
    $region50: #{_decoder_device.3} parent=5 // pred_check_branch
      %356 = sbr.rel (%p354) target = $region52
    $region51: #{_decoder_device.3} parent=5 // pred_region
      // Predicated region
      $region53: #{_decoder_device.3} parent=51 // pred_check
        %p357 = pneg %p38
      $region54: #{_decoder_device.3} parent=51 // pred_check_branch
        %359 = sbr.rel (%p357) target = $region56
      $region55: #{_decoder_device.3} parent=51 // pred_region
        %p360 = scmp.lt.s32.totalorder %s18, 1
        %s361 = scalar_select %p360, %s18, 1
        %s362 = smul.addr %s361, 8
        %s363 = scalar_lea.vmem %s0, %s362
      $region56: #{_decoder_device.3} parent=51 // pred_fallthru
        _
      // Predicated region
      $region57: #{_decoder_device.3} parent=51 // pred_check
        %p364 = pneg %p64
      $region58: #{_decoder_device.3} parent=51 // pred_check_branch
        %366 = sbr.rel (%p364) target = $region60
      $region59: #{_decoder_device.3} parent=51 // pred_region
        %p367 = scmp.lt.s32.totalorder %s18, 1
        %s368 = scalar_select %p367, %s18, 1
        %s369 = smul.addr %s368, 8
        %s370 = scalar_lea.vmem %s1, %s369
      $region60: #{_decoder_device.3} parent=51 // pred_fallthru
        _
      // Predicated region
      $region61: #{_decoder_device.3} parent=51 // pred_check
        %p371 = pneg %p90
      $region62: #{_decoder_device.3} parent=51 // pred_check_branch
        %373 = sbr.rel (%p371) target = $region64
      $region63: #{_decoder_device.3} parent=51 // pred_region
        %p374 = scmp.lt.s32.totalorder %s18, 1
        %s375 = scalar_select %p374, %s18, 1
        %s376 = smul.addr %s375, 8
        %s377 = scalar_lea.vmem %s2, %s376
      $region64: #{_decoder_device.3} parent=51 // pred_fallthru
        _
    $region52: #{_decoder_device.3} parent=5 // pred_fallthru
      _
    %p378 = scmp.le.s32.totalorder 1, %s18
    %p379 = scmp.lt.s32.totalorder %s18, 3
    %p380 = pnand %p378, %p379
    %p381 = pneg %p380
    // Predicated region
    $region65: #{_decoder_device.3} parent=5 // pred_check
      _
    $region66: #{_decoder_device.3} parent=5 // pred_check_branch
      %383 = sbr.rel (%p380) target = $region68
    $region67: #{_decoder_device.3} parent=5 // pred_region
      %s384 = ssub.s32 %s18, 1
      %p385 = scmp.lt.s32.totalorder %s23, 1
      %s386 = scalar_select %p385, %s23, 1
      %s387 = smul.addr %s386, 8
      %s388 = scalar_lea.vmem %s0, %s387
      %p389 = pneg %p44
      %p390 = pneg %p41
      %p391 = scmp.lt.s32.totalorder %s23, 1
      %s392 = scalar_select %p391, %s23, 1
      %s393 = smul.addr %s392, 8
      %s394 = scalar_lea.vmem %s1, %s393
      %p395 = pneg %p70
      %p396 = pneg %p67
      %p397 = scmp.lt.s32.totalorder %s23, 1
      %s398 = scalar_select %p397, %s23, 1
      %s399 = smul.addr %s398, 8
      %s400 = scalar_lea.vmem %s2, %s399
      %p401 = pneg %p96
      %p402 = pneg %p93
      %p403 = pneg %p117
      %p404 = pneg %p114
      %p405 = pneg %p138
      %p406 = pneg %p135
      %p407 = pneg %p159
      %p408 = pneg %p156
      %p409 = pneg %p180
      %p410 = pneg %p177
      %p411 = pneg %p201
      %p412 = pneg %p198
      %p413 = pneg %p222
      %p414 = pneg %p219
      %p415 = pneg %p243
      %p416 = pneg %p240
      %p417 = pneg %p264
      %p418 = pneg %p261
      %p419 = pneg %p285
      %p420 = pneg %p282
      %p421 = pneg %p311
      %p422 = pneg %p308
      %p423 = scmp.lt.s32.totalorder %s23, 1
      %s424 = scalar_select %p423, %s23, 1
      %s425 = smul.addr %s424, 8
      %s426 = scalar_lea.vmem %s12, %s425
      %p427 = scmp.lt.s32.totalorder %s23, 1
      %s428 = scalar_select %p427, %s23, 1
      %s429 = smul.addr %s428, 8
      %s430 = scalar_lea.vmem %s0, %s429
      %p431 = scmp.lt.s32.totalorder %s23, 1
      %s432 = scalar_select %p431, %s23, 1
      %s433 = smul.addr %s432, 8
      %s434 = scalar_lea.vmem %s1, %s433
      %p435 = scmp.lt.s32.totalorder %s23, 1
      %s436 = scalar_select %p435, %s23, 1
      %s437 = smul.addr %s436, 8
      %s438 = scalar_lea.vmem %s2, %s437
      %p439 = scmp.lt.s32.totalorder %s23, 1
      %s440 = scalar_select %p439, %s23, 1
      %s441 = smul.addr %s440, 8
      %s442 = scalar_lea.vmem %s12, %s441
      %v443 = vld [vmem:[%s430] sm:$0xff]
      %v444 = vld [vmem:[%s434] sm:$0xff]
      %v445 = vld [vmem:[%s11] sm:$0xff]
      %v446 = vld [vmem:[%s11 + $0x8] sm:$0xff]
      %v447 = vld [vmem:[%s11 + $0x10] sm:$0xff]
      %v448 = vld [vmem:[%s11 + $0x18] sm:$0xff]
      %v449 = vld [vmem:[%s11 + $0x20] sm:$0xff]
      %v450 = vld [vmem:[%s11 + $0x28] sm:$0xff]
      %v451 = vld [vmem:[%s11 + $0x30] sm:$0xff]
      %v452 = vld [vmem:[%s11 + $0x38] sm:$0xff]
      %v453 = vld [vmem:[%s11 + $0x40] sm:$0xff]
      %v454 = vld [vmem:[%s11 + $0x48] sm:$0xff]
      %v455 = vld [vmem:[%s11 + $0x50] sm:$0xff]
      %v456 = vld [vmem:[%s11 + $0x58] sm:$0xff]
      %v457 = vld [vmem:[%s11 + $0x60] sm:$0xff]
      %v458 = vld [vmem:[%s11 + $0x68] sm:$0xff]
      %v459 = vld [vmem:[%s11 + $0x70] sm:$0xff]
      %v460 = vld [vmem:[%s11 + $0x78] sm:$0xff]
      %461 = vmatprep.subr.mxu0 0.0
      %462 = vmatpush1.msra.mxu0 %v445
      %463 = vmatprep.subr.mxu0 0.0
      %464 = vmatpush1.msra.mxu0 %v446
      %465 = vmatprep.subr.mxu0 0.0
      %466 = vmatpush1.msra.mxu0 %v447
      %467 = vmatprep.subr.mxu0 0.0
      %468 = vmatpush1.msra.mxu0 %v448
      %469 = vmatprep.subr.mxu0 0.0
      %470 = vmatpush1.msra.mxu0 %v449
      %471 = vmatprep.subr.mxu0 0.0
      %472 = vmatpush1.msra.mxu0 %v450
      %473 = vmatprep.subr.mxu0 0.0
      %474 = vmatpush1.msra.mxu0 %v451
      %475 = vmatprep.subr.mxu0 0.0
      %476 = vmatpush1.msra.mxu0 %v452
      %477 = vmatprep.subr.mxu0 0.0
      %478 = vmatpush1.msra.mxu0 %v453
      %479 = vmatprep.subr.mxu0 0.0
      %480 = vmatpush1.msra.mxu0 %v454
      %481 = vmatprep.subr.mxu0 0.0
      %482 = vmatpush1.msra.mxu0 %v455
      %483 = vmatprep.subr.mxu0 0.0
      %484 = vmatpush1.msra.mxu0 %v456
      %485 = vmatprep.subr.mxu0 0.0
      %486 = vmatpush1.msra.mxu0 %v457
      %487 = vmatprep.subr.mxu0 0.0
      %488 = vmatpush1.msra.mxu0 %v458
      %489 = vmatprep.subr.mxu0 0.0
      %490 = vmatpush1.msra.mxu0 %v459
      %491 = vmatprep.subr.mxu0 0.0
      %492 = vmatpush1.msra.mxu0 %v460
      %493 = vmatprep.subr.mxu0 0.0
      %494 = vmatpush1.msra.mxu0 0.0
      %495 = vmatprep.subr.mxu0 0.0
      %496 = vmatpush1.msra.mxu0 0.0
      %497 = vmatprep.subr.mxu0 0.0
      %498 = vmatpush1.msra.mxu0 0.0
      %499 = vmatprep.subr.mxu0 0.0
      %500 = vmatpush1.msra.mxu0 0.0
      %501 = vmatprep.subr.mxu0 0.0
      %502 = vmatpush1.msra.mxu0 0.0
      %503 = vmatprep.subr.mxu0 0.0
      %504 = vmatpush1.msra.mxu0 0.0
      %505 = vmatprep.subr.mxu0 0.0
      %506 = vmatpush1.msra.mxu0 0.0
      %507 = vmatprep.subr.mxu0 0.0
      %508 = vmatpush1.msra.mxu0 0.0
      %509 = vmatprep.subr.mxu0 0.0
      %510 = vmatpush1.msra.mxu0 0.0
      %511 = vmatprep.subr.mxu0 0.0
      %512 = vmatpush1.msra.mxu0 0.0
      %513 = vmatprep.subr.mxu0 0.0
      %514 = vmatpush1.msra.mxu0 0.0
      %515 = vmatprep.subr.mxu0 0.0
      %516 = vmatpush1.msra.mxu0 0.0
      %517 = vmatprep.subr.mxu0 0.0
      %518 = vmatpush1.msra.mxu0 0.0
      %519 = vmatprep.subr.mxu0 0.0
      %520 = vmatpush1.msra.mxu0 0.0
      %521 = vmatprep.subr.mxu0 0.0
      %522 = vmatpush1.msra.mxu0 0.0
      %523 = vmatprep.subr.mxu0 0.0
      %524 = vmatpush1.msra.mxu0 0.0
      %525 = vmatprep.mubr.f32.mxu0 0.0
      %526 = vmatmul.mubr.f32.gmra.mrb[0].mxu0 %v444
      %v527 = vpop.f32.mrb[0].mxu0
      %v528 = vadd.f32 0.0, %v527
      %v529 = vpop.f32.mrb[0].mxu0
      %530 = vdwg.mxu0
      %v531 = vld [vmem:[%s3] sm:$0xff]
      %v532 = vld [vmem:[%s3 + $0x8] sm:$0xff]
      %v533 = vld [vmem:[%s3 + $0x10] sm:$0xff]
      %v534 = vld [vmem:[%s3 + $0x18] sm:$0xff]
      %v535 = vld [vmem:[%s4] sm:$0xff]
      %v536 = vld [vmem:[%s4 + $0x8] sm:$0xff]
      %v537 = vld [vmem:[%s4 + $0x10] sm:$0xff]
      %v538 = vld [vmem:[%s4 + $0x18] sm:$0xff]
      %vm539 = vcmask 261120
      %v541 = vsel %vm539, %v528, 0
      %543 = vmatprep.subr.mxu0 0.0
      %544 = vmatpush1.msra.mxu0 %v535
      %545 = vmatprep.subr.mxu0 0.0
      %546 = vmatpush1.msra.mxu0 %v536
      %547 = vmatprep.subr.mxu0 0.0
      %548 = vmatpush1.msra.mxu0 %v537
      %549 = vmatprep.subr.mxu0 0.0
      %550 = vmatpush1.msra.mxu0 %v538
      %551 = vmatprep.subr.mxu0 0.0
      %552 = vmatpush1.msra.mxu0 0.0
      %553 = vmatprep.subr.mxu0 0.0
      %554 = vmatpush1.msra.mxu0 0.0
      %555 = vmatprep.subr.mxu0 0.0
      %556 = vmatpush1.msra.mxu0 0.0
      %557 = vmatprep.subr.mxu0 0.0
      %558 = vmatpush1.msra.mxu0 0.0
      %559 = vmatprep.subr.mxu0 0.0
      %560 = vmatpush1.msra.mxu0 0.0
      %561 = vmatprep.subr.mxu0 0.0
      %562 = vmatpush1.msra.mxu0 0.0
      %563 = vmatprep.subr.mxu0 0.0
      %564 = vmatpush1.msra.mxu0 0.0
      %565 = vmatprep.subr.mxu0 0.0
      %566 = vmatpush1.msra.mxu0 0.0
      %567 = vmatprep.subr.mxu0 0.0
      %568 = vmatpush1.msra.mxu0 0.0
      %569 = vmatprep.subr.mxu0 0.0
      %570 = vmatpush1.msra.mxu0 0.0
      %571 = vmatprep.subr.mxu0 0.0
      %572 = vmatpush1.msra.mxu0 0.0
      %573 = vmatprep.subr.mxu0 0.0
      %574 = vmatpush1.msra.mxu0 0.0
      %575 = vmatprep.subr.mxu0 0.0
      %576 = vmatpush1.msra.mxu0 0.0
      %577 = vmatprep.subr.mxu0 0.0
      %578 = vmatpush1.msra.mxu0 0.0
      %579 = vmatprep.subr.mxu0 0.0
      %580 = vmatpush1.msra.mxu0 0.0
      %581 = vmatprep.subr.mxu0 0.0
      %582 = vmatpush1.msra.mxu0 0.0
      %583 = vmatprep.subr.mxu0 0.0
      %584 = vmatpush1.msra.mxu0 0.0
      %585 = vmatprep.subr.mxu0 0.0
      %586 = vmatpush1.msra.mxu0 0.0
      %587 = vmatprep.subr.mxu0 0.0
      %588 = vmatpush1.msra.mxu0 0.0
      %589 = vmatprep.subr.mxu0 0.0
      %590 = vmatpush1.msra.mxu0 0.0
      %591 = vmatprep.subr.mxu0 0.0
      %592 = vmatpush1.msra.mxu0 0.0
      %593 = vmatprep.subr.mxu0 0.0
      %594 = vmatpush1.msra.mxu0 0.0
      %595 = vmatprep.subr.mxu0 0.0
      %596 = vmatpush1.msra.mxu0 0.0
      %597 = vmatprep.subr.mxu0 0.0
      %598 = vmatpush1.msra.mxu0 0.0
      %599 = vmatprep.subr.mxu0 0.0
      %600 = vmatpush1.msra.mxu0 0.0
      %601 = vmatprep.subr.mxu0 0.0
      %602 = vmatpush1.msra.mxu0 0.0
      %603 = vmatprep.subr.mxu0 0.0
      %604 = vmatpush1.msra.mxu0 0.0
      %605 = vmatprep.subr.mxu0 0.0
      %606 = vmatpush1.msra.mxu0 0.0
      %607 = vmatprep.mubr.f32.mxu0 0.0
      %608 = vmatmul.mubr.f32.gmra.mrb[0].mxu0 %v541
      %v609 = vpop.f32.mrb[0].mxu0
      %v610 = vadd.f32 0.0, %v609
      %v611 = vpop.f32.mrb[0].mxu0
      %612 = vdwg.mxu0
      %v614 = vsel %vm539, %v443, 0
      %616 = vmatprep.subr.mxu0 0.0
      %617 = vmatpush1.msra.mxu0 %v531
      %618 = vmatprep.subr.mxu0 0.0
      %619 = vmatpush1.msra.mxu0 %v532
      %620 = vmatprep.subr.mxu0 0.0
      %621 = vmatpush1.msra.mxu0 %v533
      %622 = vmatprep.subr.mxu0 0.0
      %623 = vmatpush1.msra.mxu0 %v534
      %624 = vmatprep.subr.mxu0 0.0
      %625 = vmatpush1.msra.mxu0 0.0
      %626 = vmatprep.subr.mxu0 0.0
      %627 = vmatpush1.msra.mxu0 0.0
      %628 = vmatprep.subr.mxu0 0.0
      %629 = vmatpush1.msra.mxu0 0.0
      %630 = vmatprep.subr.mxu0 0.0
      %631 = vmatpush1.msra.mxu0 0.0
      %632 = vmatprep.subr.mxu0 0.0
      %633 = vmatpush1.msra.mxu0 0.0
      %634 = vmatprep.subr.mxu0 0.0
      %635 = vmatpush1.msra.mxu0 0.0
      %636 = vmatprep.subr.mxu0 0.0
      %637 = vmatpush1.msra.mxu0 0.0
      %638 = vmatprep.subr.mxu0 0.0
      %639 = vmatpush1.msra.mxu0 0.0
      %640 = vmatprep.subr.mxu0 0.0
      %641 = vmatpush1.msra.mxu0 0.0
      %642 = vmatprep.subr.mxu0 0.0
      %643 = vmatpush1.msra.mxu0 0.0
      %644 = vmatprep.subr.mxu0 0.0
      %645 = vmatpush1.msra.mxu0 0.0
      %646 = vmatprep.subr.mxu0 0.0
      %647 = vmatpush1.msra.mxu0 0.0
      %648 = vmatprep.subr.mxu0 0.0
      %649 = vmatpush1.msra.mxu0 0.0
      %650 = vmatprep.subr.mxu0 0.0
      %651 = vmatpush1.msra.mxu0 0.0
      %652 = vmatprep.subr.mxu0 0.0
      %653 = vmatpush1.msra.mxu0 0.0
      %654 = vmatprep.subr.mxu0 0.0
      %655 = vmatpush1.msra.mxu0 0.0
      %656 = vmatprep.subr.mxu0 0.0
      %657 = vmatpush1.msra.mxu0 0.0
      %658 = vmatprep.subr.mxu0 0.0
      %659 = vmatpush1.msra.mxu0 0.0
      %660 = vmatprep.subr.mxu0 0.0
      %661 = vmatpush1.msra.mxu0 0.0
      %662 = vmatprep.subr.mxu0 0.0
      %663 = vmatpush1.msra.mxu0 0.0
      %664 = vmatprep.subr.mxu0 0.0
      %665 = vmatpush1.msra.mxu0 0.0
      %666 = vmatprep.subr.mxu0 0.0
      %667 = vmatpush1.msra.mxu0 0.0
      %668 = vmatprep.subr.mxu0 0.0
      %669 = vmatpush1.msra.mxu0 0.0
      %670 = vmatprep.subr.mxu0 0.0
      %671 = vmatpush1.msra.mxu0 0.0
      %672 = vmatprep.subr.mxu0 0.0
      %673 = vmatpush1.msra.mxu0 0.0
      %674 = vmatprep.subr.mxu0 0.0
      %675 = vmatpush1.msra.mxu0 0.0
      %676 = vmatprep.subr.mxu0 0.0
      %677 = vmatpush1.msra.mxu0 0.0
      %678 = vmatprep.subr.mxu0 0.0
      %679 = vmatpush1.msra.mxu0 0.0
      %680 = vmatprep.mubr.f32.mxu0 0.0
      %681 = vmatmul.mubr.f32.gmra.mrb[0].mxu0 %v614
      %v682 = vpop.f32.mrb[0].mxu0
      %v683 = vadd.f32 %v610, %v682
      %v684 = vpop.f32.mrb[0].mxu0
      %685 = vdwg.mxu0
      %v686 = vld [vmem:[%s5] sm:$0x1]
      %v688 = vlaneseq
      %v689 = vshrl.u32 %v688, 7
      %v690 = vsub.s32 0, %v689
      %v691 = vrot.slane %v686, %v690
      %v693 = vadd.f32 %v683, %v691
      %v694 = vmax.f32 %v693, 0.0
      %v695 = vld [vmem:[%s6] sm:$0xff]
      %v696 = vld [vmem:[%s6 + $0x8] sm:$0xff]
      %v697 = vld [vmem:[%s6 + $0x10] sm:$0xff]
      %v698 = vld [vmem:[%s6 + $0x18] sm:$0xff]
      %v699 = vld [vmem:[%s438] sm:$0xff]
      %v700 = vld [vmem:[%s7] sm:$0xff]
      %v701 = vld [vmem:[%s7 + $0x8] sm:$0xff]
      %v702 = vld [vmem:[%s7 + $0x10] sm:$0xff]
      %v703 = vld [vmem:[%s7 + $0x18] sm:$0xff]
      %v705 = vsel %vm539, %v699, 0
      %707 = vmatprep.subr.mxu0 0.0
      %708 = vmatpush1.msra.mxu0 %v700
      %709 = vmatprep.subr.mxu0 0.0
      %710 = vmatpush1.msra.mxu0 %v701
      %711 = vmatprep.subr.mxu0 0.0
      %712 = vmatpush1.msra.mxu0 %v702
      %713 = vmatprep.subr.mxu0 0.0
      %714 = vmatpush1.msra.mxu0 %v703
      %715 = vmatprep.subr.mxu0 0.0
      %716 = vmatpush1.msra.mxu0 0.0
      %717 = vmatprep.subr.mxu0 0.0
      %718 = vmatpush1.msra.mxu0 0.0
      %719 = vmatprep.subr.mxu0 0.0
      %720 = vmatpush1.msra.mxu0 0.0
      %721 = vmatprep.subr.mxu0 0.0
      %722 = vmatpush1.msra.mxu0 0.0
      %723 = vmatprep.subr.mxu0 0.0
      %724 = vmatpush1.msra.mxu0 0.0
      %725 = vmatprep.subr.mxu0 0.0
      %726 = vmatpush1.msra.mxu0 0.0
      %727 = vmatprep.subr.mxu0 0.0
      %728 = vmatpush1.msra.mxu0 0.0
      %729 = vmatprep.subr.mxu0 0.0
      %730 = vmatpush1.msra.mxu0 0.0
      %731 = vmatprep.subr.mxu0 0.0
      %732 = vmatpush1.msra.mxu0 0.0
      %733 = vmatprep.subr.mxu0 0.0
      %734 = vmatpush1.msra.mxu0 0.0
      %735 = vmatprep.subr.mxu0 0.0
      %736 = vmatpush1.msra.mxu0 0.0
      %737 = vmatprep.subr.mxu0 0.0
      %738 = vmatpush1.msra.mxu0 0.0
      %739 = vmatprep.subr.mxu0 0.0
      %740 = vmatpush1.msra.mxu0 0.0
      %741 = vmatprep.subr.mxu0 0.0
      %742 = vmatpush1.msra.mxu0 0.0
      %743 = vmatprep.subr.mxu0 0.0
      %744 = vmatpush1.msra.mxu0 0.0
      %745 = vmatprep.subr.mxu0 0.0
      %746 = vmatpush1.msra.mxu0 0.0
      %747 = vmatprep.subr.mxu0 0.0
      %748 = vmatpush1.msra.mxu0 0.0
      %749 = vmatprep.subr.mxu0 0.0
      %750 = vmatpush1.msra.mxu0 0.0
      %751 = vmatprep.subr.mxu0 0.0
      %752 = vmatpush1.msra.mxu0 0.0
      %753 = vmatprep.subr.mxu0 0.0
      %754 = vmatpush1.msra.mxu0 0.0
      %755 = vmatprep.subr.mxu0 0.0
      %756 = vmatpush1.msra.mxu0 0.0
      %757 = vmatprep.subr.mxu0 0.0
      %758 = vmatpush1.msra.mxu0 0.0
      %759 = vmatprep.subr.mxu0 0.0
      %760 = vmatpush1.msra.mxu0 0.0
      %761 = vmatprep.subr.mxu0 0.0
      %762 = vmatpush1.msra.mxu0 0.0
      %763 = vmatprep.subr.mxu0 0.0
      %764 = vmatpush1.msra.mxu0 0.0
      %765 = vmatprep.subr.mxu0 0.0
      %766 = vmatpush1.msra.mxu0 0.0
      %767 = vmatprep.subr.mxu0 0.0
      %768 = vmatpush1.msra.mxu0 0.0
      %769 = vmatprep.subr.mxu0 0.0
      %770 = vmatpush1.msra.mxu0 0.0
      %771 = vmatprep.mubr.f32.mxu0 0.0
      %772 = vmatmul.mubr.f32.gmra.mrb[0].mxu0 %v705
      %v773 = vpop.f32.mrb[0].mxu0
      %v774 = vadd.f32 0.0, %v773
      %v775 = vpop.f32.mrb[0].mxu0
      %776 = vdwg.mxu0
      %v778 = vsel %vm539, %v694, 0
      %780 = vmatprep.subr.mxu0 0.0
      %781 = vmatpush1.msra.mxu0 %v695
      %782 = vmatprep.subr.mxu0 0.0
      %783 = vmatpush1.msra.mxu0 %v696
      %784 = vmatprep.subr.mxu0 0.0
      %785 = vmatpush1.msra.mxu0 %v697
      %786 = vmatprep.subr.mxu0 0.0
      %787 = vmatpush1.msra.mxu0 %v698
      %788 = vmatprep.subr.mxu0 0.0
      %789 = vmatpush1.msra.mxu0 0.0
      %790 = vmatprep.subr.mxu0 0.0
      %791 = vmatpush1.msra.mxu0 0.0
      %792 = vmatprep.subr.mxu0 0.0
      %793 = vmatpush1.msra.mxu0 0.0
      %794 = vmatprep.subr.mxu0 0.0
      %795 = vmatpush1.msra.mxu0 0.0
      %796 = vmatprep.subr.mxu0 0.0
      %797 = vmatpush1.msra.mxu0 0.0
      %798 = vmatprep.subr.mxu0 0.0
      %799 = vmatpush1.msra.mxu0 0.0
      %800 = vmatprep.subr.mxu0 0.0
      %801 = vmatpush1.msra.mxu0 0.0
      %802 = vmatprep.subr.mxu0 0.0
      %803 = vmatpush1.msra.mxu0 0.0
      %804 = vmatprep.subr.mxu0 0.0
      %805 = vmatpush1.msra.mxu0 0.0
      %806 = vmatprep.subr.mxu0 0.0
      %807 = vmatpush1.msra.mxu0 0.0
      %808 = vmatprep.subr.mxu0 0.0
      %809 = vmatpush1.msra.mxu0 0.0
      %810 = vmatprep.subr.mxu0 0.0
      %811 = vmatpush1.msra.mxu0 0.0
      %812 = vmatprep.subr.mxu0 0.0
      %813 = vmatpush1.msra.mxu0 0.0
      %814 = vmatprep.subr.mxu0 0.0
      %815 = vmatpush1.msra.mxu0 0.0
      %816 = vmatprep.subr.mxu0 0.0
      %817 = vmatpush1.msra.mxu0 0.0
      %818 = vmatprep.subr.mxu0 0.0
      %819 = vmatpush1.msra.mxu0 0.0
      %820 = vmatprep.subr.mxu0 0.0
      %821 = vmatpush1.msra.mxu0 0.0
      %822 = vmatprep.subr.mxu0 0.0
      %823 = vmatpush1.msra.mxu0 0.0
      %824 = vmatprep.subr.mxu0 0.0
      %825 = vmatpush1.msra.mxu0 0.0
      %826 = vmatprep.subr.mxu0 0.0
      %827 = vmatpush1.msra.mxu0 0.0
      %828 = vmatprep.subr.mxu0 0.0
      %829 = vmatpush1.msra.mxu0 0.0
      %830 = vmatprep.subr.mxu0 0.0
      %831 = vmatpush1.msra.mxu0 0.0
      %832 = vmatprep.subr.mxu0 0.0
      %833 = vmatpush1.msra.mxu0 0.0
      %834 = vmatprep.subr.mxu0 0.0
      %835 = vmatpush1.msra.mxu0 0.0
      %836 = vmatprep.subr.mxu0 0.0
      %837 = vmatpush1.msra.mxu0 0.0
      %838 = vmatprep.subr.mxu0 0.0
      %839 = vmatpush1.msra.mxu0 0.0
      %840 = vmatprep.subr.mxu0 0.0
      %841 = vmatpush1.msra.mxu0 0.0
      %842 = vmatprep.subr.mxu0 0.0
      %843 = vmatpush1.msra.mxu0 0.0
      %844 = vmatprep.mubr.f32.mxu0 0.0
      %845 = vmatmul.mubr.f32.gmra.mrb[0].mxu0 %v778
      %v846 = vpop.f32.mrb[0].mxu0
      %v847 = vadd.f32 %v774, %v846
      %v848 = vpop.f32.mrb[0].mxu0
      %849 = vdwg.mxu0
      %v850 = vld [vmem:[%s8] sm:$0x1]
      %v852 = vlaneseq
      %v853 = vshrl.u32 %v852, 7
      %v854 = vsub.s32 0, %v853
      %v855 = vrot.slane %v850, %v854
      %v857 = vadd.f32 %v847, %v855
      %v858 = vmax.f32 %v857, 0.0
      %v859 = vld [vmem:[%s9] sm:$0xff]
      %v860 = vld [vmem:[%s9 + $0x8] sm:$0xff]
      %v861 = vld [vmem:[%s9 + $0x10] sm:$0xff]
      %v862 = vld [vmem:[%s9 + $0x18] sm:$0xff]
      %v863 = vld [vmem:[%s10] sm:$0x1]
      %v865 = vlaneseq
      %v866 = vshrl.u32 %v865, 7
      %v867 = vsub.s32 0, %v866
      %v868 = vrot.slane %v863, %v867
      %v871 = vsel %vm539, %v858, 0
      %873 = vmatprep.subr.mxu0 0.0
      %874 = vmatpush1.msra.mxu0 %v859
      %875 = vmatprep.subr.mxu0 0.0
      %876 = vmatpush1.msra.mxu0 %v860
      %877 = vmatprep.subr.mxu0 0.0
      %878 = vmatpush1.msra.mxu0 %v861
      %879 = vmatprep.subr.mxu0 0.0
      %880 = vmatpush1.msra.mxu0 %v862
      %881 = vmatprep.subr.mxu0 0.0
      %882 = vmatpush1.msra.mxu0 0.0
      %883 = vmatprep.subr.mxu0 0.0
      %884 = vmatpush1.msra.mxu0 0.0
      %885 = vmatprep.subr.mxu0 0.0
      %886 = vmatpush1.msra.mxu0 0.0
      %887 = vmatprep.subr.mxu0 0.0
      %888 = vmatpush1.msra.mxu0 0.0
      %889 = vmatprep.subr.mxu0 0.0
      %890 = vmatpush1.msra.mxu0 0.0
      %891 = vmatprep.subr.mxu0 0.0
      %892 = vmatpush1.msra.mxu0 0.0
      %893 = vmatprep.subr.mxu0 0.0
      %894 = vmatpush1.msra.mxu0 0.0
      %895 = vmatprep.subr.mxu0 0.0
      %896 = vmatpush1.msra.mxu0 0.0
      %897 = vmatprep.subr.mxu0 0.0
      %898 = vmatpush1.msra.mxu0 0.0
      %899 = vmatprep.subr.mxu0 0.0
      %900 = vmatpush1.msra.mxu0 0.0
      %901 = vmatprep.subr.mxu0 0.0
      %902 = vmatpush1.msra.mxu0 0.0
      %903 = vmatprep.subr.mxu0 0.0
      %904 = vmatpush1.msra.mxu0 0.0
      %905 = vmatprep.subr.mxu0 0.0
      %906 = vmatpush1.msra.mxu0 0.0
      %907 = vmatprep.subr.mxu0 0.0
      %908 = vmatpush1.msra.mxu0 0.0
      %909 = vmatprep.subr.mxu0 0.0
      %910 = vmatpush1.msra.mxu0 0.0
      %911 = vmatprep.subr.mxu0 0.0
      %912 = vmatpush1.msra.mxu0 0.0
      %913 = vmatprep.subr.mxu0 0.0
      %914 = vmatpush1.msra.mxu0 0.0
      %915 = vmatprep.subr.mxu0 0.0
      %916 = vmatpush1.msra.mxu0 0.0
      %917 = vmatprep.subr.mxu0 0.0
      %918 = vmatpush1.msra.mxu0 0.0
      %919 = vmatprep.subr.mxu0 0.0
      %920 = vmatpush1.msra.mxu0 0.0
      %921 = vmatprep.subr.mxu0 0.0
      %922 = vmatpush1.msra.mxu0 0.0
      %923 = vmatprep.subr.mxu0 0.0
      %924 = vmatpush1.msra.mxu0 0.0
      %925 = vmatprep.subr.mxu0 0.0
      %926 = vmatpush1.msra.mxu0 0.0
      %927 = vmatprep.subr.mxu0 0.0
      %928 = vmatpush1.msra.mxu0 0.0
      %929 = vmatprep.subr.mxu0 0.0
      %930 = vmatpush1.msra.mxu0 0.0
      %931 = vmatprep.subr.mxu0 0.0
      %932 = vmatpush1.msra.mxu0 0.0
      %933 = vmatprep.subr.mxu0 0.0
      %934 = vmatpush1.msra.mxu0 0.0
      %935 = vmatprep.subr.mxu0 0.0
      %936 = vmatpush1.msra.mxu0 0.0
      %937 = vmatprep.mubr.f32.mxu0 0.0
      %938 = vmatmul.mubr.f32.gmra.mrb[0].mxu0 %v871
      %v939 = vpop.f32.mrb[0].mxu0
      %v940 = vadd.f32 %v868, %v939
      %v941 = vpop.f32.mrb[0].mxu0
      %942 = vdwg.mxu0
      %943 = vst [vmem:[%s442] sm:$0xff] %v940
      %p944 = scmp.lt.s32.totalorder %s23, 1
      %s945 = scalar_select %p944, %s23, 1
      %s946 = smul.addr %s945, 8
      %s947 = scalar_lea.vmem %s12, %s946
      // Predicated region
      $region69: #{_decoder_device.3} parent=67 // pred_check
        %p948 = pneg %p308
      $region70: #{_decoder_device.3} parent=67 // pred_check_branch
        %950 = sbr.rel (%p948) target = $region72
      $region71: #{_decoder_device.3} parent=67 // pred_region
        _
      $region72: #{_decoder_device.3} parent=67 // pred_fallthru
        _
    $region68: #{_decoder_device.3} parent=5 // pred_fallthru
      _
    %p951 = scmp.le.s32.totalorder 2, %s18
    // Predicated region
    $region73: #{_decoder_device.3} parent=5 // pred_check
      %p952 = pneg %p951
    $region74: #{_decoder_device.3} parent=5 // pred_check_branch
      %954 = sbr.rel (%p952) target = $region76
    $region75: #{_decoder_device.3} parent=5 // pred_region
      %s955 = ssub.s32 %s18, 2
      // Predicated region
      $region77: #{_decoder_device.3} parent=75 // pred_check
        %p956 = pneg %p314
      $region78: #{_decoder_device.3} parent=75 // pred_check_branch
        %958 = sbr.rel (%p956) target = $region80
      $region79: #{_decoder_device.3} parent=75 // pred_region
        %p959 = scmp.lt.s32.totalorder %s24, 1
        %s960 = scalar_select %p959, %s24, 1
        %s961 = smul.addr %s960, 8
        %s962 = scalar_lea.vmem %s12, %s961
      $region80: #{_decoder_device.3} parent=75 // pred_fallthru
        _
    $region76: #{_decoder_device.3} parent=5 // pred_fallthru
      _
  $region6: #{_decoder_device.3} parent=0 // loop_footer
    %s22 = sadd.s32 1, %s18
  $region7: #{_decoder_device.3} parent=0 // loop_footer_branch
    %17 = sbr.rel target = $region3
  $region8: #{_decoder_device.3} parent=0 // loop_exit
    _

</llo_original>
